<compile_context>
chip_gen: v6e
topology: v6e:2x2x1
jax: 0.10.0
libtpu: 0.0.40
codegen_flags: <defaults>
</compile_context>

<pallas_src>
import functools

import jax
import jax.numpy as jnp
from jax.experimental import pallas as pl
from jax.experimental.pallas import tpu as pltpu


# ----------------------------------------------------------------------------
# Kernel 1: stem conv as an M-tiled GEMM + bias + ReLU (bf16 output)
# ----------------------------------------------------------------------------
def _stem_matmul_kernel(x_ref, w_ref, b_ref, o_ref):
    # x: [TM, K]  w: [K, N]  b: [1, N]  ->  o: [TM, N]  (f32 MXU accumulation)
    acc = jnp.dot(x_ref[...], w_ref[...], preferred_element_type=jnp.float32)
    o_ref[...] = jnp.maximum(acc + b_ref[...], 0.0).astype(o_ref.dtype)


def stem_matmul_bias_relu(x, w, b, *, out_dtype=jnp.bfloat16, tm_cap=1024):
    M, K = x.shape
    K2, N = w.shape
    assert K == K2 and b.shape == (1, N)
    tm = M if M <= tm_cap else tm_cap            # tm_cap is a multiple of 8
    grid_m = pl.cdiv(M, tm)
    cost = pl.CostEstimate(
        flops=2 * M * K * N,
        transcendentals=0,
        bytes_accessed=(M * K + K * N + N) * 4 + M * N * 2)
    return pl.pallas_call(
        _stem_matmul_kernel,
        out_shape=jax.ShapeDtypeStruct((M, N), out_dtype),
        grid=(grid_m,),
        in_specs=[
            pl.BlockSpec((tm, K), lambda i: (i, 0)),
            pl.BlockSpec((K, N), lambda i: (0, 0)),    # weights stay resident
            pl.BlockSpec((1, N), lambda i: (0, 0)),    # bias stays resident
        ],
        out_specs=pl.BlockSpec((tm, N), lambda i: (i, 0)),
        compiler_params=pltpu.CompilerParams(
            dimension_semantics=("parallel",)),        # 2-TC sharding on v7x
        cost_estimate=cost,
    )(x, w, b)


# ----------------------------------------------------------------------------
# Kernel 2: fused 3x3 same-conv + bias + ReLU + global average pool
# ----------------------------------------------------------------------------
def _conv3x3_relu_gap_kernel(h1p_ref, w2_ref, b2_ref, o_ref):
    # h1p_ref: [1, Hp, Wp, C1] zero-padded bf16 image (Hp = Ho+2, Wp = Wo+2)
    # w2_ref : [9, C1, C2] bf16 (tap-major: t = dh*3 + dw)
    # b2_ref : [1, C2] f32
    # o_ref  : [1, 1, C2] f32   (pooled feature vector for this image)
    _, Hp, Wp, _ = h1p_ref.shape
    Ho, Wo = Hp - 2, Wp - 2
    C2 = w2_ref.shape[2]

    w2 = w2_ref[...]                       # resident tap weights
    b2 = b2_ref[...]

    def row_body(h, gap_acc):
        # 3 padded input rows feed output row h; all taps are static 2-D
        # slices of this slab -> no in-kernel im2col materialization.
        slab = h1p_ref[0, pl.ds(h, 3), :, :]                  # (3, Wp, C1)
        row_acc = jnp.zeros((Wo, C2), jnp.float32)
        for t in range(9):                                    # 9 conv taps
            dh, dw = divmod(t, 3)
            tap = slab[dh, dw:dw + Wo, :]                     # (Wo, C1) bf16
            row_acc = row_acc + jnp.dot(tap, w2[t],
                                        preferred_element_type=jnp.float32)
        row_out = jnp.maximum(row_acc + b2, 0.0)              # bias + ReLU
        return gap_acc + jnp.sum(row_out, axis=0, keepdims=True)

    # Short static trip count -> unroll so the LLO scheduler sees all 9*Ho
    # MXU pushes at once; large images keep the rolled loop (code size).
    gap = jax.lax.fori_loop(0, Ho, row_body,
                            jnp.zeros((1, C2), jnp.float32),
                            unroll=(Ho <= 8))
    o_ref[...] = (gap * (1.0 / (Ho * Wo))).astype(o_ref.dtype).reshape(o_ref.shape)


def conv3x3_relu_gap(h1p, w2, b2):
    B, Hp, Wp, C1 = h1p.shape
    C2 = w2.shape[2]
    Ho, Wo = Hp - 2, Wp - 2
    cost = pl.CostEstimate(
        flops=2 * B * Ho * Wo * 9 * C1 * C2,
        transcendentals=0,
        bytes_accessed=B * Hp * Wp * C1 * 2 + 9 * C1 * C2 * 2 + C2 * 4 + B * C2 * 4)
    out = pl.pallas_call(
        _conv3x3_relu_gap_kernel,
        out_shape=jax.ShapeDtypeStruct((B, 1, C2), jnp.float32),
        grid=(B,),
        in_specs=[
            pl.BlockSpec((1, Hp, Wp, C1), lambda b: (b, 0, 0, 0)),
            pl.BlockSpec((9, C1, C2), lambda b: (0, 0, 0)),   # resident
            pl.BlockSpec((1, C2), lambda b: (0, 0)),          # resident
        ],
        out_specs=pl.BlockSpec((1, 1, C2), lambda b: (b, 0, 0)),
        compiler_params=pltpu.CompilerParams(
            dimension_semantics=("parallel",)),
        cost_estimate=cost,
    )(h1p, w2, b2)
    return out[:, 0, :]                     # [B, C2]


# ----------------------------------------------------------------------------
# Parameters & forward (glue in plain JAX: reshapes / zero-pad only)
# ----------------------------------------------------------------------------
def init_params(key, c_in=3, c1=32, c2=64, k_stem=4):
    k1, k2, k3, k4 = jax.random.split(key, 4)
    K_stem = k_stem * k_stem * c_in
    return {
        "w1": jax.random.normal(k1, (K_stem, c1), jnp.float32) / jnp.sqrt(K_stem),
        "b1": jax.random.normal(k2, (1, c1), jnp.float32) * 0.01,
        "w2": jax.random.normal(k3, (9, c1, c2), jnp.float32) / jnp.sqrt(9 * c1),
        "b2": jax.random.normal(k4, (1, c2), jnp.float32) * 0.01,
    }


@functools.partial(jax.jit, static_argnames=("k_stem",))
def image_encoder_forward(x_nchw, params, k_stem=4):
    """x_nchw: [B, C, H, W] -> pooled features [B, C2] (float32)."""
    x = jnp.transpose(x_nchw, (0, 2, 3, 1)).astype(jnp.float32)   # NCHW -> NHWC
    B, H, W, C = x.shape
    assert H % k_stem == 0 and W % k_stem == 0, "H, W must be divisible by the stem stride"
    Ho, Wo = H // k_stem, W // k_stem
    C1 = params["w1"].shape[1]

    # Stem patches (kernel == stride conv): pure reshape/transpose, [M, K1].
    K1 = k_stem * k_stem * C
    p = x.reshape(B, Ho, k_stem, Wo, k_stem, C).transpose(0, 1, 3, 2, 4, 5)
    p1 = p.reshape(B * Ho * Wo, K1)

    # Lane-dense packing: fold g adjacent W-pixels into one GEMM row using a
    # block-diagonal weight; [M/g, g*K1] is the same contiguous buffer as
    # [M, K1] and the output [M/g, g*C1] is exactly NHWC h1 in row-major order.
    g = 1
    for cand in (4, 2):
        if Wo % cand == 0 and cand * C1 <= 128:
            g = cand
            break
    p1w = p1.reshape((B * Ho * Wo) // g, g * K1)
    if g > 1:
        w1w = jax.scipy.linalg.block_diag(*([params["w1"]] * g))
        b1w = jnp.tile(params["b1"], (1, g))
    else:
        w1w, b1w = params["w1"], params["b1"]

    h1w = stem_matmul_bias_relu(p1w, w1w, b1w)          # [M/g, g*C1] bf16
    h1 = h1w.reshape(B, Ho, Wo, C1)                     # NHWC, bf16

    # Zero-pad once (same semantics as Conv2d(padding=1)); the 3x3 conv, bias,
    # ReLU and global average pool are fused in a single Pallas kernel.
    h1p = jnp.pad(h1, ((0, 0), (1, 1), (1, 1), (0, 0)))
    w2 = params["w2"].astype(jnp.bfloat16)              # [9, C1, C2]
    return conv3x3_relu_gap(h1p, w2, params["b2"])      # [B, C2] f32


def reference_forward(x_nchw, params, k_stem=4):
    """Pure-JAX reference with the same bf16 intermediate rounding."""
    x = jnp.transpose(x_nchw, (0, 2, 3, 1)).astype(jnp.float32)
    B, H, W, C = x.shape
    Ho, Wo = H // k_stem, W // k_stem
    p = x.reshape(B, Ho, k_stem, Wo, k_stem, C).transpose(0, 1, 3, 2, 4, 5)
    p1 = p.reshape(B * Ho * Wo, -1)
    h1 = jnp.maximum(p1 @ params["w1"] + params["b1"], 0.0).astype(jnp.bfloat16)
    h1 = h1.reshape(B, Ho, Wo, -1)
    h1p = jnp.pad(h1, ((0, 0), (1, 1), (1, 1), (0, 0)))
    w2 = params["w2"].astype(jnp.bfloat16)
    C2 = w2.shape[2]
    out = jnp.zeros((B, Ho, Wo, C2), jnp.float32)
    for t in range(9):
        dh, dw = divmod(t, 3)
        tap = h1p[:, dh:dh + Ho, dw:dw + Wo, :].astype(jnp.float32)
        out = out + jnp.einsum("bhwc,cd->bhwd", tap, w2[t].astype(jnp.float32))
    out = jnp.maximum(out + params["b2"].reshape(1, 1, 1, C2), 0.0)
    return out.mean(axis=(1, 2))


if __name__ == "__main__":
    key = jax.random.PRNGKey(0)
    k_x, k_p = jax.random.split(key)

    # Small NCHW image batch consistent with the module's forward.
    x = jax.random.normal(k_x, (2, 3, 16, 16), jnp.float32)
    params = init_params(k_p)

    feats = image_encoder_forward(x, params)
    feats = jax.block_until_ready(feats)

    assert feats.shape == (2, 64), feats.shape
    assert bool(jnp.all(jnp.isfinite(feats)))

    ref = reference_forward(x, params)
    assert bool(jnp.allclose(feats, ref, atol=5e-2, rtol=5e-2)), (
        "mismatch vs reference", float(jnp.max(jnp.abs(feats - ref))))

    print("KERNEL_OK")
</pallas_src>

<mosaic_0001>
module attributes {stable_mosaic.version = 11 : i64} {
  func.func @_stem_matmul_kernel(%arg0: i32, %arg1: memref<8x192xf32, #tpu.memory_space<vmem>>, %arg2: memref<192x128xf32, #tpu.memory_space<vmem>>, %arg3: memref<1x128xf32, #tpu.memory_space<vmem>>, %arg4: memref<8x128xbf16, #tpu.memory_space<vmem>>) attributes {dimension_semantics = [#tpu.dimension_semantics<parallel>], iteration_bounds = array<i64: 1>, scalar_prefetch = 0 : i64, scratch_operands = 0 : i64, tpu.core_type = #tpu.core_type<tc>, window_params = [{transform_indices = @transform_0, window_bounds = array<i64: 8, 192>}, {pipeline_mode = #tpu.pipeline_mode<synchronous>, transform_indices = @transform_1, window_bounds = array<i64: 192, 128>}, {pipeline_mode = #tpu.pipeline_mode<synchronous>, transform_indices = @transform_2, window_bounds = array<i64: 1, 128>}, {transform_indices = @transform_3, window_bounds = array<i64: 8, 128>}]} {
    %c0 = arith.constant 0 : index
    %c0_0 = arith.constant 0 : index
    %0 = vector.load %arg1[%c0, %c0_0] : memref<8x192xf32, #tpu.memory_space<vmem>>, vector<8x192xf32>
    %c0_1 = arith.constant 0 : index
    %c0_2 = arith.constant 0 : index
    %1 = vector.load %arg2[%c0_1, %c0_2] : memref<192x128xf32, #tpu.memory_space<vmem>>, vector<192x128xf32>
    %cst = arith.constant dense<0.000000e+00> : vector<8x128xf32>
    %2 = tpu.matmul %0, %1, %cst {dimension_numbers = #tpu.dot_dimension_numbers<[1], [0], [0], [1], [0, 0, 1, 1], [], []>} : vector<8x192xf32>, vector<192x128xf32>, vector<8x128xf32> -> vector<8x128xf32>
    %c0_3 = arith.constant 0 : index
    %c0_4 = arith.constant 0 : index
    %3 = vector.load %arg3[%c0_3, %c0_4] : memref<1x128xf32, #tpu.memory_space<vmem>>, vector<1x128xf32>
    %4 = vector.broadcast %3 : vector<1x128xf32> to vector<8x128xf32>
    %5 = arith.addf %2, %4 : vector<8x128xf32>
    %cst_5 = arith.constant 0.000000e+00 : f32
    %6 = vector.broadcast %cst_5 : f32 to vector<8x128xf32>
    %7 = arith.maximumf %5, %6 : vector<8x128xf32>
    %8 = arith.truncf %7 : vector<8x128xf32> to vector<8x128xbf16>
    %c0_6 = arith.constant 0 : index
    %c0_7 = arith.constant 0 : index
    %9 = vector.load %arg4[%c0_6, %c0_7] : memref<8x128xbf16, #tpu.memory_space<vmem>>, vector<8x128xbf16>
    tpu.vector_store %arg4[%c0_6, %c0_7], %8 {strides = array<i32>} : memref<8x128xbf16, #tpu.memory_space<vmem>>, vector<8x128xbf16>,
    return
  }
  func.func @transform_0(%arg0: i32) -> (i32, i32) {
    %c0_i32 = arith.constant 0 : i32
    %c0_i32_0 = arith.constant 0 : i32
    return %arg0, %c0_i32 : i32, i32
  }
  func.func @transform_1(%arg0: i32) -> (i32, i32) {
    %c0_i32 = arith.constant 0 : i32
    %c0_i32_0 = arith.constant 0 : i32
    %c0_i32_1 = arith.constant 0 : i32
    return %c0_i32, %c0_i32_0 : i32, i32
  }
  func.func @transform_2(%arg0: i32) -> (i32, i32) {
    %c0_i32 = arith.constant 0 : i32
    %c0_i32_0 = arith.constant 0 : i32
    %c0_i32_1 = arith.constant 0 : i32
    return %c0_i32, %c0_i32_0 : i32, i32
  }
  func.func @transform_3(%arg0: i32) -> (i32, i32) {
    %c0_i32 = arith.constant 0 : i32
    %c0_i32_0 = arith.constant 0 : i32
    return %arg0, %c0_i32 : i32, i32
  }
}

module attributes {stable_mosaic.version = 11 : i64} {
  func.func @_conv3x3_relu_gap_kernel(%arg0: i32, %arg1: memref<1x6x6x32xbf16, #tpu.memory_space<vmem>>, %arg2: memref<9x32x64xbf16, #tpu.memory_space<vmem>>, %arg3: memref<1x64xf32, #tpu.memory_space<vmem>>, %arg4: memref<1x1x64xf32, #tpu.memory_space<vmem>>) attributes {dimension_semantics = [#tpu.dimension_semantics<parallel>], iteration_bounds = array<i64: 2>, scalar_prefetch = 0 : i64, scratch_operands = 0 : i64, tpu.core_type = #tpu.core_type<tc>, window_params = [{transform_indices = @transform_0, window_bounds = array<i64: 1, 6, 6, 32>}, {pipeline_mode = #tpu.pipeline_mode<synchronous>, transform_indices = @transform_1, window_bounds = array<i64: 9, 32, 64>}, {pipeline_mode = #tpu.pipeline_mode<synchronous>, transform_indices = @transform_2, window_bounds = array<i64: 1, 64>}, {transform_indices = @transform_3, window_bounds = array<i64: 1, 1, 64>}]} {
    %c0 = arith.constant 0 : index
    %c0_0 = arith.constant 0 : index
    %c0_1 = arith.constant 0 : index
    %0 = vector.load %arg2[%c0, %c0_0, %c0_1] : memref<9x32x64xbf16, #tpu.memory_space<vmem>>, vector<9x32x64xbf16>
    %c0_2 = arith.constant 0 : index
    %c0_3 = arith.constant 0 : index
    %1 = vector.load %arg3[%c0_2, %c0_3] : memref<1x64xf32, #tpu.memory_space<vmem>>, vector<1x64xf32>
    %cst = arith.constant 0.000000e+00 : f32
    %2 = vector.broadcast %cst : f32 to vector<1x64xf32>
    %c0_i32 = arith.constant 0 : i32
    %c0_4 = arith.constant 0 : index
    %3 = arith.index_cast %c0_i32 : i32 to index
    %c0_5 = arith.constant 0 : index
    %c0_6 = arith.constant 0 : index
    %4 = vector.load %arg1[%c0_4, %3, %c0_5, %c0_6] : memref<1x6x6x32xbf16, #tpu.memory_space<vmem>>, vector<1x3x6x32xbf16>
    %5 = vector.shape_cast %4 : vector<1x3x6x32xbf16> to vector<3x6x32xbf16>
    %cst_7 = arith.constant 0.000000e+00 : f32
    %6 = vector.broadcast %cst_7 : f32 to vector<4x64xf32>
    %7 = vector.extract_strided_slice %5 {offsets = [0, 0, 0], sizes = [1, 4, 32], strides = [1, 1, 1]} : vector<3x6x32xbf16> to vector<1x4x32xbf16>
    %8 = vector.shape_cast %7 : vector<1x4x32xbf16> to vector<4x32xbf16>
    %9 = vector.extract_strided_slice %0 {offsets = [0, 0, 0], sizes = [1, 32, 64], strides = [1, 1, 1]} : vector<9x32x64xbf16> to vector<1x32x64xbf16>
    %10 = vector.shape_cast %9 : vector<1x32x64xbf16> to vector<32x64xbf16>
    %cst_8 = arith.constant dense<0.000000e+00> : vector<4x64xf32>
    %11 = tpu.matmul %8, %10, %cst_8 {dimension_numbers = #tpu.dot_dimension_numbers<[1], [0], [0], [1], [0, 0, 1, 1], [], []>} : vector<4x32xbf16>, vector<32x64xbf16>, vector<4x64xf32> -> vector<4x64xf32>
    %12 = arith.addf %6, %11 : vector<4x64xf32>
    %13 = vector.extract_strided_slice %5 {offsets = [0, 1, 0], sizes = [1, 4, 32], strides = [1, 1, 1]} : vector<3x6x32xbf16> to vector<1x4x32xbf16>
    %14 = vector.shape_cast %13 : vector<1x4x32xbf16> to vector<4x32xbf16>
    %15 = vector.extract_strided_slice %0 {offsets = [1, 0, 0], sizes = [1, 32, 64], strides = [1, 1, 1]} : vector<9x32x64xbf16> to vector<1x32x64xbf16>
    %16 = vector.shape_cast %15 : vector<1x32x64xbf16> to vector<32x64xbf16>
    %cst_9 = arith.constant dense<0.000000e+00> : vector<4x64xf32>
    %17 = tpu.matmul %14, %16, %cst_9 {dimension_numbers = #tpu.dot_dimension_numbers<[1], [0], [0], [1], [0, 0, 1, 1], [], []>} : vector<4x32xbf16>, vector<32x64xbf16>, vector<4x64xf32> -> vector<4x64xf32>
    %18 = arith.addf %12, %17 : vector<4x64xf32>
    %19 = vector.extract_strided_slice %5 {offsets = [0, 2, 0], sizes = [1, 4, 32], strides = [1, 1, 1]} : vector<3x6x32xbf16> to vector<1x4x32xbf16>
    %20 = vector.shape_cast %19 : vector<1x4x32xbf16> to vector<4x32xbf16>
    %21 = vector.extract_strided_slice %0 {offsets = [2, 0, 0], sizes = [1, 32, 64], strides = [1, 1, 1]} : vector<9x32x64xbf16> to vector<1x32x64xbf16>
    %22 = vector.shape_cast %21 : vector<1x32x64xbf16> to vector<32x64xbf16>
    %cst_10 = arith.constant dense<0.000000e+00> : vector<4x64xf32>
    %23 = tpu.matmul %20, %22, %cst_10 {dimension_numbers = #tpu.dot_dimension_numbers<[1], [0], [0], [1], [0, 0, 1, 1], [], []>} : vector<4x32xbf16>, vector<32x64xbf16>, vector<4x64xf32> -> vector<4x64xf32>
    %24 = arith.addf %18, %23 : vector<4x64xf32>
    %25 = vector.extract_strided_slice %5 {offsets = [1, 0, 0], sizes = [1, 4, 32], strides = [1, 1, 1]} : vector<3x6x32xbf16> to vector<1x4x32xbf16>
    %26 = vector.shape_cast %25 : vector<1x4x32xbf16> to vector<4x32xbf16>
    %27 = vector.extract_strided_slice %0 {offsets = [3, 0, 0], sizes = [1, 32, 64], strides = [1, 1, 1]} : vector<9x32x64xbf16> to vector<1x32x64xbf16>
    %28 = vector.shape_cast %27 : vector<1x32x64xbf16> to vector<32x64xbf16>
    %cst_11 = arith.constant dense<0.000000e+00> : vector<4x64xf32>
    %29 = tpu.matmul %26, %28, %cst_11 {dimension_numbers = #tpu.dot_dimension_numbers<[1], [0], [0], [1], [0, 0, 1, 1], [], []>} : vector<4x32xbf16>, vector<32x64xbf16>, vector<4x64xf32> -> vector<4x64xf32>
    %30 = arith.addf %24, %29 : vector<4x64xf32>
    %31 = vector.extract_strided_slice %5 {offsets = [1, 1, 0], sizes = [1, 4, 32], strides = [1, 1, 1]} : vector<3x6x32xbf16> to vector<1x4x32xbf16>
    %32 = vector.shape_cast %31 : vector<1x4x32xbf16> to vector<4x32xbf16>
    %33 = vector.extract_strided_slice %0 {offsets = [4, 0, 0], sizes = [1, 32, 64], strides = [1, 1, 1]} : vector<9x32x64xbf16> to vector<1x32x64xbf16>
    %34 = vector.shape_cast %33 : vector<1x32x64xbf16> to vector<32x64xbf16>
    %cst_12 = arith.constant dense<0.000000e+00> : vector<4x64xf32>
    %35 = tpu.matmul %32, %34, %cst_12 {dimension_numbers = #tpu.dot_dimension_numbers<[1], [0], [0], [1], [0, 0, 1, 1], [], []>} : vector<4x32xbf16>, vector<32x64xbf16>, vector<4x64xf32> -> vector<4x64xf32>
    %36 = arith.addf %30, %35 : vector<4x64xf32>
    %37 = vector.extract_strided_slice %5 {offsets = [1, 2, 0], sizes = [1, 4, 32], strides = [1, 1, 1]} : vector<3x6x32xbf16> to vector<1x4x32xbf16>
    %38 = vector.shape_cast %37 : vector<1x4x32xbf16> to vector<4x32xbf16>
    %39 = vector.extract_strided_slice %0 {offsets = [5, 0, 0], sizes = [1, 32, 64], strides = [1, 1, 1]} : vector<9x32x64xbf16> to vector<1x32x64xbf16>
    %40 = vector.shape_cast %39 : vector<1x32x64xbf16> to vector<32x64xbf16>
    %cst_13 = arith.constant dense<0.000000e+00> : vector<4x64xf32>
    %41 = tpu.matmul %38, %40, %cst_13 {dimension_numbers = #tpu.dot_dimension_numbers<[1], [0], [0], [1], [0, 0, 1, 1], [], []>} : vector<4x32xbf16>, vector<32x64xbf16>, vector<4x64xf32> -> vector<4x64xf32>
    %42 = arith.addf %36, %41 : vector<4x64xf32>
    %43 = vector.extract_strided_slice %5 {offsets = [2, 0, 0], sizes = [1, 4, 32], strides = [1, 1, 1]} : vector<3x6x32xbf16> to vector<1x4x32xbf16>
    %44 = vector.shape_cast %43 : vector<1x4x32xbf16> to vector<4x32xbf16>
    %45 = vector.extract_strided_slice %0 {offsets = [6, 0, 0], sizes = [1, 32, 64], strides = [1, 1, 1]} : vector<9x32x64xbf16> to vector<1x32x64xbf16>
    %46 = vector.shape_cast %45 : vector<1x32x64xbf16> to vector<32x64xbf16>
    %cst_14 = arith.constant dense<0.000000e+00> : vector<4x64xf32>
    %47 = tpu.matmul %44, %46, %cst_14 {dimension_numbers = #tpu.dot_dimension_numbers<[1], [0], [0], [1], [0, 0, 1, 1], [], []>} : vector<4x32xbf16>, vector<32x64xbf16>, vector<4x64xf32> -> vector<4x64xf32>
    %48 = arith.addf %42, %47 : vector<4x64xf32>
    %49 = vector.extract_strided_slice %5 {offsets = [2, 1, 0], sizes = [1, 4, 32], strides = [1, 1, 1]} : vector<3x6x32xbf16> to vector<1x4x32xbf16>
    %50 = vector.shape_cast %49 : vector<1x4x32xbf16> to vector<4x32xbf16>
    %51 = vector.extract_strided_slice %0 {offsets = [7, 0, 0], sizes = [1, 32, 64], strides = [1, 1, 1]} : vector<9x32x64xbf16> to vector<1x32x64xbf16>
    %52 = vector.shape_cast %51 : vector<1x32x64xbf16> to vector<32x64xbf16>
    %cst_15 = arith.constant dense<0.000000e+00> : vector<4x64xf32>
    %53 = tpu.matmul %50, %52, %cst_15 {dimension_numbers = #tpu.dot_dimension_numbers<[1], [0], [0], [1], [0, 0, 1, 1], [], []>} : vector<4x32xbf16>, vector<32x64xbf16>, vector<4x64xf32> -> vector<4x64xf32>
    %54 = arith.addf %48, %53 : vector<4x64xf32>
    %55 = vector.extract_strided_slice %5 {offsets = [2, 2, 0], sizes = [1, 4, 32], strides = [1, 1, 1]} : vector<3x6x32xbf16> to vector<1x4x32xbf16>
    %56 = vector.shape_cast %55 : vector<1x4x32xbf16> to vector<4x32xbf16>
    %57 = vector.extract_strided_slice %0 {offsets = [8, 0, 0], sizes = [1, 32, 64], strides = [1, 1, 1]} : vector<9x32x64xbf16> to vector<1x32x64xbf16>
    %58 = vector.shape_cast %57 : vector<1x32x64xbf16> to vector<32x64xbf16>
    %cst_16 = arith.constant dense<0.000000e+00> : vector<4x64xf32>
    %59 = tpu.matmul %56, %58, %cst_16 {dimension_numbers = #tpu.dot_dimension_numbers<[1], [0], [0], [1], [0, 0, 1, 1], [], []>} : vector<4x32xbf16>, vector<32x64xbf16>, vector<4x64xf32> -> vector<4x64xf32>
    %60 = arith.addf %54, %59 : vector<4x64xf32>
    %61 = vector.broadcast %1 : vector<1x64xf32> to vector<4x64xf32>
    %62 = arith.addf %60, %61 : vector<4x64xf32>
    %cst_17 = arith.constant 0.000000e+00 : f32
    %63 = vector.broadcast %cst_17 : f32 to vector<4x64xf32>
    %64 = arith.maximumf %62, %63 : vector<4x64xf32>
    %cst_18 = arith.constant dense<0.000000e+00> : vector<64xf32>
    %65 = vector.multi_reduction <add>, %64, %cst_18 [0] : vector<4x64xf32> to vector<64xf32>
    %66 = vector.shape_cast %65 : vector<64xf32> to vector<1x64xf32>
    %67 = arith.addf %2, %66 : vector<1x64xf32>
    %c1_i32 = arith.constant 1 : i32
    %c0_19 = arith.constant 0 : index
    %68 = arith.index_cast %c1_i32 : i32 to index
    %c0_20 = arith.constant 0 : index
    %c0_21 = arith.constant 0 : index
    %69 = vector.load %arg1[%c0_19, %68, %c0_20, %c0_21] : memref<1x6x6x32xbf16, #tpu.memory_space<vmem>>, vector<1x3x6x32xbf16>
    %70 = vector.shape_cast %69 : vector<1x3x6x32xbf16> to vector<3x6x32xbf16>
    %cst_22 = arith.constant 0.000000e+00 : f32
    %71 = vector.broadcast %cst_22 : f32 to vector<4x64xf32>
    %72 = vector.extract_strided_slice %70 {offsets = [0, 0, 0], sizes = [1, 4, 32], strides = [1, 1, 1]} : vector<3x6x32xbf16> to vector<1x4x32xbf16>
    %73 = vector.shape_cast %72 : vector<1x4x32xbf16> to vector<4x32xbf16>
    %74 = vector.extract_strided_slice %0 {offsets = [0, 0, 0], sizes = [1, 32, 64], strides = [1, 1, 1]} : vector<9x32x64xbf16> to vector<1x32x64xbf16>
    %75 = vector.shape_cast %74 : vector<1x32x64xbf16> to vector<32x64xbf16>
    %cst_23 = arith.constant dense<0.000000e+00> : vector<4x64xf32>
    %76 = tpu.matmul %73, %75, %cst_23 {dimension_numbers = #tpu.dot_dimension_numbers<[1], [0], [0], [1], [0, 0, 1, 1], [], []>} : vector<4x32xbf16>, vector<32x64xbf16>, vector<4x64xf32> -> vector<4x64xf32>
    %77 = arith.addf %71, %76 : vector<4x64xf32>
    %78 = vector.extract_strided_slice %70 {offsets = [0, 1, 0], sizes = [1, 4, 32], strides = [1, 1, 1]} : vector<3x6x32xbf16> to vector<1x4x32xbf16>
    %79 = vector.shape_cast %78 : vector<1x4x32xbf16> to vector<4x32xbf16>
    %80 = vector.extract_strided_slice %0 {offsets = [1, 0, 0], sizes = [1, 32, 64], strides = [1, 1, 1]} : vector<9x32x64xbf16> to vector<1x32x64xbf16>
    %81 = vector.shape_cast %80 : vector<1x32x64xbf16> to vector<32x64xbf16>
    %cst_24 = arith.constant dense<0.000000e+00> : vector<4x64xf32>
    %82 = tpu.matmul %79, %81, %cst_24 {dimension_numbers = #tpu.dot_dimension_numbers<[1], [0], [0], [1], [0, 0, 1, 1], [], []>} : vector<4x32xbf16>, vector<32x64xbf16>, vector<4x64xf32> -> vector<4x64xf32>
    %83 = arith.addf %77, %82 : vector<4x64xf32>
    %84 = vector.extract_strided_slice %70 {offsets = [0, 2, 0], sizes = [1, 4, 32], strides = [1, 1, 1]} : vector<3x6x32xbf16> to vector<1x4x32xbf16>
    %85 = vector.shape_cast %84 : vector<1x4x32xbf16> to vector<4x32xbf16>
    %86 = vector.extract_strided_slice %0 {offsets = [2, 0, 0], sizes = [1, 32, 64], strides = [1, 1, 1]} : vector<9x32x64xbf16> to vector<1x32x64xbf16>
    %87 = vector.shape_cast %86 : vector<1x32x64xbf16> to vector<32x64xbf16>
    %cst_25 = arith.constant dense<0.000000e+00> : vector<4x64xf32>
    %88 = tpu.matmul %85, %87, %cst_25 {dimension_numbers = #tpu.dot_dimension_numbers<[1], [0], [0], [1], [0, 0, 1, 1], [], []>} : vector<4x32xbf16>, vector<32x64xbf16>, vector<4x64xf32> -> vector<4x64xf32>
    %89 = arith.addf %83, %88 : vector<4x64xf32>
    %90 = vector.extract_strided_slice %70 {offsets = [1, 0, 0], sizes = [1, 4, 32], strides = [1, 1, 1]} : vector<3x6x32xbf16> to vector<1x4x32xbf16>
    %91 = vector.shape_cast %90 : vector<1x4x32xbf16> to vector<4x32xbf16>
    %92 = vector.extract_strided_slice %0 {offsets = [3, 0, 0], sizes = [1, 32, 64], strides = [1, 1, 1]} : vector<9x32x64xbf16> to vector<1x32x64xbf16>
    %93 = vector.shape_cast %92 : vector<1x32x64xbf16> to vector<32x64xbf16>
    %cst_26 = arith.constant dense<0.000000e+00> : vector<4x64xf32>
    %94 = tpu.matmul %91, %93, %cst_26 {dimension_numbers = #tpu.dot_dimension_numbers<[1], [0], [0], [1], [0, 0, 1, 1], [], []>} : vector<4x32xbf16>, vector<32x64xbf16>, vector<4x64xf32> -> vector<4x64xf32>
    %95 = arith.addf %89, %94 : vector<4x64xf32>
    %96 = vector.extract_strided_slice %70 {offsets = [1, 1, 0], sizes = [1, 4, 32], strides = [1, 1, 1]} : vector<3x6x32xbf16> to vector<1x4x32xbf16>
    %97 = vector.shape_cast %96 : vector<1x4x32xbf16> to vector<4x32xbf16>
    %98 = vector.extract_strided_slice %0 {offsets = [4, 0, 0], sizes = [1, 32, 64], strides = [1, 1, 1]} : vector<9x32x64xbf16> to vector<1x32x64xbf16>
    %99 = vector.shape_cast %98 : vector<1x32x64xbf16> to vector<32x64xbf16>
    %cst_27 = arith.constant dense<0.000000e+00> : vector<4x64xf32>
    %100 = tpu.matmul %97, %99, %cst_27 {dimension_numbers = #tpu.dot_dimension_numbers<[1], [0], [0], [1], [0, 0, 1, 1], [], []>} : vector<4x32xbf16>, vector<32x64xbf16>, vector<4x64xf32> -> vector<4x64xf32>
    %101 = arith.addf %95, %100 : vector<4x64xf32>
    %102 = vector.extract_strided_slice %70 {offsets = [1, 2, 0], sizes = [1, 4, 32], strides = [1, 1, 1]} : vector<3x6x32xbf16> to vector<1x4x32xbf16>
    %103 = vector.shape_cast %102 : vector<1x4x32xbf16> to vector<4x32xbf16>
    %104 = vector.extract_strided_slice %0 {offsets = [5, 0, 0], sizes = [1, 32, 64], strides = [1, 1, 1]} : vector<9x32x64xbf16> to vector<1x32x64xbf16>
    %105 = vector.shape_cast %104 : vector<1x32x64xbf16> to vector<32x64xbf16>
    %cst_28 = arith.constant dense<0.000000e+00> : vector<4x64xf32>
    %106 = tpu.matmul %103, %105, %cst_28 {dimension_numbers = #tpu.dot_dimension_numbers<[1], [0], [0], [1], [0, 0, 1, 1], [], []>} : vector<4x32xbf16>, vector<32x64xbf16>, vector<4x64xf32> -> vector<4x64xf32>
    %107 = arith.addf %101, %106 : vector<4x64xf32>
    %108 = vector.extract_strided_slice %70 {offsets = [2, 0, 0], sizes = [1, 4, 32], strides = [1, 1, 1]} : vector<3x6x32xbf16> to vector<1x4x32xbf16>
    %109 = vector.shape_cast %108 : vector<1x4x32xbf16> to vector<4x32xbf16>
    %110 = vector.extract_strided_slice %0 {offsets = [6, 0, 0], sizes = [1, 32, 64], strides = [1, 1, 1]} : vector<9x32x64xbf16> to vector<1x32x64xbf16>
    %111 = vector.shape_cast %110 : vector<1x32x64xbf16> to vector<32x64xbf16>
    %cst_29 = arith.constant dense<0.000000e+00> : vector<4x64xf32>
    %112 = tpu.matmul %109, %111, %cst_29 {dimension_numbers = #tpu.dot_dimension_numbers<[1], [0], [0], [1], [0, 0, 1, 1], [], []>} : vector<4x32xbf16>, vector<32x64xbf16>, vector<4x64xf32> -> vector<4x64xf32>
    %113 = arith.addf %107, %112 : vector<4x64xf32>
    %114 = vector.extract_strided_slice %70 {offsets = [2, 1, 0], sizes = [1, 4, 32], strides = [1, 1, 1]} : vector<3x6x32xbf16> to vector<1x4x32xbf16>
    %115 = vector.shape_cast %114 : vector<1x4x32xbf16> to vector<4x32xbf16>
    %116 = vector.extract_strided_slice %0 {offsets = [7, 0, 0], sizes = [1, 32, 64], strides = [1, 1, 1]} : vector<9x32x64xbf16> to vector<1x32x64xbf16>
    %117 = vector.shape_cast %116 : vector<1x32x64xbf16> to vector<32x64xbf16>
    %cst_30 = arith.constant dense<0.000000e+00> : vector<4x64xf32>
    %118 = tpu.matmul %115, %117, %cst_30 {dimension_numbers = #tpu.dot_dimension_numbers<[1], [0], [0], [1], [0, 0, 1, 1], [], []>} : vector<4x32xbf16>, vector<32x64xbf16>, vector<4x64xf32> -> vector<4x64xf32>
    %119 = arith.addf %113, %118 : vector<4x64xf32>
    %120 = vector.extract_strided_slice %70 {offsets = [2, 2, 0], sizes = [1, 4, 32], strides = [1, 1, 1]} : vector<3x6x32xbf16> to vector<1x4x32xbf16>
    %121 = vector.shape_cast %120 : vector<1x4x32xbf16> to vector<4x32xbf16>
    %122 = vector.extract_strided_slice %0 {offsets = [8, 0, 0], sizes = [1, 32, 64], strides = [1, 1, 1]} : vector<9x32x64xbf16> to vector<1x32x64xbf16>
    %123 = vector.shape_cast %122 : vector<1x32x64xbf16> to vector<32x64xbf16>
    %cst_31 = arith.constant dense<0.000000e+00> : vector<4x64xf32>
    %124 = tpu.matmul %121, %123, %cst_31 {dimension_numbers = #tpu.dot_dimension_numbers<[1], [0], [0], [1], [0, 0, 1, 1], [], []>} : vector<4x32xbf16>, vector<32x64xbf16>, vector<4x64xf32> -> vector<4x64xf32>
    %125 = arith.addf %119, %124 : vector<4x64xf32>
    %126 = vector.broadcast %1 : vector<1x64xf32> to vector<4x64xf32>
    %127 = arith.addf %125, %126 : vector<4x64xf32>
    %cst_32 = arith.constant 0.000000e+00 : f32
    %128 = vector.broadcast %cst_32 : f32 to vector<4x64xf32>
    %129 = arith.maximumf %127, %128 : vector<4x64xf32>
    %cst_33 = arith.constant dense<0.000000e+00> : vector<64xf32>
    %130 = vector.multi_reduction <add>, %129, %cst_33 [0] : vector<4x64xf32> to vector<64xf32>
    %131 = vector.shape_cast %130 : vector<64xf32> to vector<1x64xf32>
    %132 = arith.addf %67, %131 : vector<1x64xf32>
    %c2_i32 = arith.constant 2 : i32
    %c0_34 = arith.constant 0 : index
    %133 = arith.index_cast %c2_i32 : i32 to index
    %c0_35 = arith.constant 0 : index
    %c0_36 = arith.constant 0 : index
    %134 = vector.load %arg1[%c0_34, %133, %c0_35, %c0_36] : memref<1x6x6x32xbf16, #tpu.memory_space<vmem>>, vector<1x3x6x32xbf16>
    %135 = vector.shape_cast %134 : vector<1x3x6x32xbf16> to vector<3x6x32xbf16>
    %cst_37 = arith.constant 0.000000e+00 : f32
    %136 = vector.broadcast %cst_37 : f32 to vector<4x64xf32>
    %137 = vector.extract_strided_slice %135 {offsets = [0, 0, 0], sizes = [1, 4, 32], strides = [1, 1, 1]} : vector<3x6x32xbf16> to vector<1x4x32xbf16>
    %138 = vector.shape_cast %137 : vector<1x4x32xbf16> to vector<4x32xbf16>
    %139 = vector.extract_strided_slice %0 {offsets = [0, 0, 0], sizes = [1, 32, 64], strides = [1, 1, 1]} : vector<9x32x64xbf16> to vector<1x32x64xbf16>
    %140 = vector.shape_cast %139 : vector<1x32x64xbf16> to vector<32x64xbf16>
    %cst_38 = arith.constant dense<0.000000e+00> : vector<4x64xf32>
    %141 = tpu.matmul %138, %140, %cst_38 {dimension_numbers = #tpu.dot_dimension_numbers<[1], [0], [0], [1], [0, 0, 1, 1], [], []>} : vector<4x32xbf16>, vector<32x64xbf16>, vector<4x64xf32> -> vector<4x64xf32>
    %142 = arith.addf %136, %141 : vector<4x64xf32>
    %143 = vector.extract_strided_slice %135 {offsets = [0, 1, 0], sizes = [1, 4, 32], strides = [1, 1, 1]} : vector<3x6x32xbf16> to vector<1x4x32xbf16>
    %144 = vector.shape_cast %143 : vector<1x4x32xbf16> to vector<4x32xbf16>
    %145 = vector.extract_strided_slice %0 {offsets = [1, 0, 0], sizes = [1, 32, 64], strides = [1, 1, 1]} : vector<9x32x64xbf16> to vector<1x32x64xbf16>
    %146 = vector.shape_cast %145 : vector<1x32x64xbf16> to vector<32x64xbf16>
    %cst_39 = arith.constant dense<0.000000e+00> : vector<4x64xf32>
    %147 = tpu.matmul %144, %146, %cst_39 {dimension_numbers = #tpu.dot_dimension_numbers<[1], [0], [0], [1], [0, 0, 1, 1], [], []>} : vector<4x32xbf16>, vector<32x64xbf16>, vector<4x64xf32> -> vector<4x64xf32>
    %148 = arith.addf %142, %147 : vector<4x64xf32>
    %149 = vector.extract_strided_slice %135 {offsets = [0, 2, 0], sizes = [1, 4, 32], strides = [1, 1, 1]} : vector<3x6x32xbf16> to vector<1x4x32xbf16>
    %150 = vector.shape_cast %149 : vector<1x4x32xbf16> to vector<4x32xbf16>
    %151 = vector.extract_strided_slice %0 {offsets = [2, 0, 0], sizes = [1, 32, 64], strides = [1, 1, 1]} : vector<9x32x64xbf16> to vector<1x32x64xbf16>
    %152 = vector.shape_cast %151 : vector<1x32x64xbf16> to vector<32x64xbf16>
    %cst_40 = arith.constant dense<0.000000e+00> : vector<4x64xf32>
    %153 = tpu.matmul %150, %152, %cst_40 {dimension_numbers = #tpu.dot_dimension_numbers<[1], [0], [0], [1], [0, 0, 1, 1], [], []>} : vector<4x32xbf16>, vector<32x64xbf16>, vector<4x64xf32> -> vector<4x64xf32>
    %154 = arith.addf %148, %153 : vector<4x64xf32>
    %155 = vector.extract_strided_slice %135 {offsets = [1, 0, 0], sizes = [1, 4, 32], strides = [1, 1, 1]} : vector<3x6x32xbf16> to vector<1x4x32xbf16>
    %156 = vector.shape_cast %155 : vector<1x4x32xbf16> to vector<4x32xbf16>
    %157 = vector.extract_strided_slice %0 {offsets = [3, 0, 0], sizes = [1, 32, 64], strides = [1, 1, 1]} : vector<9x32x64xbf16> to vector<1x32x64xbf16>
    %158 = vector.shape_cast %157 : vector<1x32x64xbf16> to vector<32x64xbf16>
    %cst_41 = arith.constant dense<0.000000e+00> : vector<4x64xf32>
    %159 = tpu.matmul %156, %158, %cst_41 {dimension_numbers = #tpu.dot_dimension_numbers<[1], [0], [0], [1], [0, 0, 1, 1], [], []>} : vector<4x32xbf16>, vector<32x64xbf16>, vector<4x64xf32> -> vector<4x64xf32>
    %160 = arith.addf %154, %159 : vector<4x64xf32>
    %161 = vector.extract_strided_slice %135 {offsets = [1, 1, 0], sizes = [1, 4, 32], strides = [1, 1, 1]} : vector<3x6x32xbf16> to vector<1x4x32xbf16>
    %162 = vector.shape_cast %161 : vector<1x4x32xbf16> to vector<4x32xbf16>
    %163 = vector.extract_strided_slice %0 {offsets = [4, 0, 0], sizes = [1, 32, 64], strides = [1, 1, 1]} : vector<9x32x64xbf16> to vector<1x32x64xbf16>
    %164 = vector.shape_cast %163 : vector<1x32x64xbf16> to vector<32x64xbf16>
    %cst_42 = arith.constant dense<0.000000e+00> : vector<4x64xf32>
    %165 = tpu.matmul %162, %164, %cst_42 {dimension_numbers = #tpu.dot_dimension_numbers<[1], [0], [0], [1], [0, 0, 1, 1], [], []>} : vector<4x32xbf16>, vector<32x64xbf16>, vector<4x64xf32> -> vector<4x64xf32>
    %166 = arith.addf %160, %165 : vector<4x64xf32>
    %167 = vector.extract_strided_slice %135 {offsets = [1, 2, 0], sizes = [1, 4, 32], strides = [1, 1, 1]} : vector<3x6x32xbf16> to vector<1x4x32xbf16>
    %168 = vector.shape_cast %167 : vector<1x4x32xbf16> to vector<4x32xbf16>
    %169 = vector.extract_strided_slice %0 {offsets = [5, 0, 0], sizes = [1, 32, 64], strides = [1, 1, 1]} : vector<9x32x64xbf16> to vector<1x32x64xbf16>
    %170 = vector.shape_cast %169 : vector<1x32x64xbf16> to vector<32x64xbf16>
    %cst_43 = arith.constant dense<0.000000e+00> : vector<4x64xf32>
    %171 = tpu.matmul %168, %170, %cst_43 {dimension_numbers = #tpu.dot_dimension_numbers<[1], [0], [0], [1], [0, 0, 1, 1], [], []>} : vector<4x32xbf16>, vector<32x64xbf16>, vector<4x64xf32> -> vector<4x64xf32>
    %172 = arith.addf %166, %171 : vector<4x64xf32>
    %173 = vector.extract_strided_slice %135 {offsets = [2, 0, 0], sizes = [1, 4, 32], strides = [1, 1, 1]} : vector<3x6x32xbf16> to vector<1x4x32xbf16>
    %174 = vector.shape_cast %173 : vector<1x4x32xbf16> to vector<4x32xbf16>
    %175 = vector.extract_strided_slice %0 {offsets = [6, 0, 0], sizes = [1, 32, 64], strides = [1, 1, 1]} : vector<9x32x64xbf16> to vector<1x32x64xbf16>
    %176 = vector.shape_cast %175 : vector<1x32x64xbf16> to vector<32x64xbf16>
    %cst_44 = arith.constant dense<0.000000e+00> : vector<4x64xf32>
    %177 = tpu.matmul %174, %176, %cst_44 {dimension_numbers = #tpu.dot_dimension_numbers<[1], [0], [0], [1], [0, 0, 1, 1], [], []>} : vector<4x32xbf16>, vector<32x64xbf16>, vector<4x64xf32> -> vector<4x64xf32>
    %178 = arith.addf %172, %177 : vector<4x64xf32>
    %179 = vector.extract_strided_slice %135 {offsets = [2, 1, 0], sizes = [1, 4, 32], strides = [1, 1, 1]} : vector<3x6x32xbf16> to vector<1x4x32xbf16>
    %180 = vector.shape_cast %179 : vector<1x4x32xbf16> to vector<4x32xbf16>
    %181 = vector.extract_strided_slice %0 {offsets = [7, 0, 0], sizes = [1, 32, 64], strides = [1, 1, 1]} : vector<9x32x64xbf16> to vector<1x32x64xbf16>
    %182 = vector.shape_cast %181 : vector<1x32x64xbf16> to vector<32x64xbf16>
    %cst_45 = arith.constant dense<0.000000e+00> : vector<4x64xf32>
    %183 = tpu.matmul %180, %182, %cst_45 {dimension_numbers = #tpu.dot_dimension_numbers<[1], [0], [0], [1], [0, 0, 1, 1], [], []>} : vector<4x32xbf16>, vector<32x64xbf16>, vector<4x64xf32> -> vector<4x64xf32>
    %184 = arith.addf %178, %183 : vector<4x64xf32>
    %185 = vector.extract_strided_slice %135 {offsets = [2, 2, 0], sizes = [1, 4, 32], strides = [1, 1, 1]} : vector<3x6x32xbf16> to vector<1x4x32xbf16>
    %186 = vector.shape_cast %185 : vector<1x4x32xbf16> to vector<4x32xbf16>
    %187 = vector.extract_strided_slice %0 {offsets = [8, 0, 0], sizes = [1, 32, 64], strides = [1, 1, 1]} : vector<9x32x64xbf16> to vector<1x32x64xbf16>
    %188 = vector.shape_cast %187 : vector<1x32x64xbf16> to vector<32x64xbf16>
    %cst_46 = arith.constant dense<0.000000e+00> : vector<4x64xf32>
    %189 = tpu.matmul %186, %188, %cst_46 {dimension_numbers = #tpu.dot_dimension_numbers<[1], [0], [0], [1], [0, 0, 1, 1], [], []>} : vector<4x32xbf16>, vector<32x64xbf16>, vector<4x64xf32> -> vector<4x64xf32>
    %190 = arith.addf %184, %189 : vector<4x64xf32>
    %191 = vector.broadcast %1 : vector<1x64xf32> to vector<4x64xf32>
    %192 = arith.addf %190, %191 : vector<4x64xf32>
    %cst_47 = arith.constant 0.000000e+00 : f32
    %193 = vector.broadcast %cst_47 : f32 to vector<4x64xf32>
    %194 = arith.maximumf %192, %193 : vector<4x64xf32>
    %cst_48 = arith.constant dense<0.000000e+00> : vector<64xf32>
    %195 = vector.multi_reduction <add>, %194, %cst_48 [0] : vector<4x64xf32> to vector<64xf32>
    %196 = vector.shape_cast %195 : vector<64xf32> to vector<1x64xf32>
    %197 = arith.addf %132, %196 : vector<1x64xf32>
    %c3_i32 = arith.constant 3 : i32
    %c0_49 = arith.constant 0 : index
    %198 = arith.index_cast %c3_i32 : i32 to index
    %c0_50 = arith.constant 0 : index
    %c0_51 = arith.constant 0 : index
    %199 = vector.load %arg1[%c0_49, %198, %c0_50, %c0_51] : memref<1x6x6x32xbf16, #tpu.memory_space<vmem>>, vector<1x3x6x32xbf16>
    %200 = vector.shape_cast %199 : vector<1x3x6x32xbf16> to vector<3x6x32xbf16>
    %cst_52 = arith.constant 0.000000e+00 : f32
    %201 = vector.broadcast %cst_52 : f32 to vector<4x64xf32>
    %202 = vector.extract_strided_slice %200 {offsets = [0, 0, 0], sizes = [1, 4, 32], strides = [1, 1, 1]} : vector<3x6x32xbf16> to vector<1x4x32xbf16>
    %203 = vector.shape_cast %202 : vector<1x4x32xbf16> to vector<4x32xbf16>
    %204 = vector.extract_strided_slice %0 {offsets = [0, 0, 0], sizes = [1, 32, 64], strides = [1, 1, 1]} : vector<9x32x64xbf16> to vector<1x32x64xbf16>
    %205 = vector.shape_cast %204 : vector<1x32x64xbf16> to vector<32x64xbf16>
    %cst_53 = arith.constant dense<0.000000e+00> : vector<4x64xf32>
    %206 = tpu.matmul %203, %205, %cst_53 {dimension_numbers = #tpu.dot_dimension_numbers<[1], [0], [0], [1], [0, 0, 1, 1], [], []>} : vector<4x32xbf16>, vector<32x64xbf16>, vector<4x64xf32> -> vector<4x64xf32>
    %207 = arith.addf %201, %206 : vector<4x64xf32>
    %208 = vector.extract_strided_slice %200 {offsets = [0, 1, 0], sizes = [1, 4, 32], strides = [1, 1, 1]} : vector<3x6x32xbf16> to vector<1x4x32xbf16>
    %209 = vector.shape_cast %208 : vector<1x4x32xbf16> to vector<4x32xbf16>
    %210 = vector.extract_strided_slice %0 {offsets = [1, 0, 0], sizes = [1, 32, 64], strides = [1, 1, 1]} : vector<9x32x64xbf16> to vector<1x32x64xbf16>
    %211 = vector.shape_cast %210 : vector<1x32x64xbf16> to vector<32x64xbf16>
    %cst_54 = arith.constant dense<0.000000e+00> : vector<4x64xf32>
    %212 = tpu.matmul %209, %211, %cst_54 {dimension_numbers = #tpu.dot_dimension_numbers<[1], [0], [0], [1], [0, 0, 1, 1], [], []>} : vector<4x32xbf16>, vector<32x64xbf16>, vector<4x64xf32> -> vector<4x64xf32>
    %213 = arith.addf %207, %212 : vector<4x64xf32>
    %214 = vector.extract_strided_slice %200 {offsets = [0, 2, 0], sizes = [1, 4, 32], strides = [1, 1, 1]} : vector<3x6x32xbf16> to vector<1x4x32xbf16>
    %215 = vector.shape_cast %214 : vector<1x4x32xbf16> to vector<4x32xbf16>
    %216 = vector.extract_strided_slice %0 {offsets = [2, 0, 0], sizes = [1, 32, 64], strides = [1, 1, 1]} : vector<9x32x64xbf16> to vector<1x32x64xbf16>
    %217 = vector.shape_cast %216 : vector<1x32x64xbf16> to vector<32x64xbf16>
    %cst_55 = arith.constant dense<0.000000e+00> : vector<4x64xf32>
    %218 = tpu.matmul %215, %217, %cst_55 {dimension_numbers = #tpu.dot_dimension_numbers<[1], [0], [0], [1], [0, 0, 1, 1], [], []>} : vector<4x32xbf16>, vector<32x64xbf16>, vector<4x64xf32> -> vector<4x64xf32>
    %219 = arith.addf %213, %218 : vector<4x64xf32>
    %220 = vector.extract_strided_slice %200 {offsets = [1, 0, 0], sizes = [1, 4, 32], strides = [1, 1, 1]} : vector<3x6x32xbf16> to vector<1x4x32xbf16>
    %221 = vector.shape_cast %220 : vector<1x4x32xbf16> to vector<4x32xbf16>
    %222 = vector.extract_strided_slice %0 {offsets = [3, 0, 0], sizes = [1, 32, 64], strides = [1, 1, 1]} : vector<9x32x64xbf16> to vector<1x32x64xbf16>
    %223 = vector.shape_cast %222 : vector<1x32x64xbf16> to vector<32x64xbf16>
    %cst_56 = arith.constant dense<0.000000e+00> : vector<4x64xf32>
    %224 = tpu.matmul %221, %223, %cst_56 {dimension_numbers = #tpu.dot_dimension_numbers<[1], [0], [0], [1], [0, 0, 1, 1], [], []>} : vector<4x32xbf16>, vector<32x64xbf16>, vector<4x64xf32> -> vector<4x64xf32>
    %225 = arith.addf %219, %224 : vector<4x64xf32>
    %226 = vector.extract_strided_slice %200 {offsets = [1, 1, 0], sizes = [1, 4, 32], strides = [1, 1, 1]} : vector<3x6x32xbf16> to vector<1x4x32xbf16>
    %227 = vector.shape_cast %226 : vector<1x4x32xbf16> to vector<4x32xbf16>
    %228 = vector.extract_strided_slice %0 {offsets = [4, 0, 0], sizes = [1, 32, 64], strides = [1, 1, 1]} : vector<9x32x64xbf16> to vector<1x32x64xbf16>
    %229 = vector.shape_cast %228 : vector<1x32x64xbf16> to vector<32x64xbf16>
    %cst_57 = arith.constant dense<0.000000e+00> : vector<4x64xf32>
    %230 = tpu.matmul %227, %229, %cst_57 {dimension_numbers = #tpu.dot_dimension_numbers<[1], [0], [0], [1], [0, 0, 1, 1], [], []>} : vector<4x32xbf16>, vector<32x64xbf16>, vector<4x64xf32> -> vector<4x64xf32>
    %231 = arith.addf %225, %230 : vector<4x64xf32>
    %232 = vector.extract_strided_slice %200 {offsets = [1, 2, 0], sizes = [1, 4, 32], strides = [1, 1, 1]} : vector<3x6x32xbf16> to vector<1x4x32xbf16>
    %233 = vector.shape_cast %232 : vector<1x4x32xbf16> to vector<4x32xbf16>
    %234 = vector.extract_strided_slice %0 {offsets = [5, 0, 0], sizes = [1, 32, 64], strides = [1, 1, 1]} : vector<9x32x64xbf16> to vector<1x32x64xbf16>
    %235 = vector.shape_cast %234 : vector<1x32x64xbf16> to vector<32x64xbf16>
    %cst_58 = arith.constant dense<0.000000e+00> : vector<4x64xf32>
    %236 = tpu.matmul %233, %235, %cst_58 {dimension_numbers = #tpu.dot_dimension_numbers<[1], [0], [0], [1], [0, 0, 1, 1], [], []>} : vector<4x32xbf16>, vector<32x64xbf16>, vector<4x64xf32> -> vector<4x64xf32>
    %237 = arith.addf %231, %236 : vector<4x64xf32>
    %238 = vector.extract_strided_slice %200 {offsets = [2, 0, 0], sizes = [1, 4, 32], strides = [1, 1, 1]} : vector<3x6x32xbf16> to vector<1x4x32xbf16>
    %239 = vector.shape_cast %238 : vector<1x4x32xbf16> to vector<4x32xbf16>
    %240 = vector.extract_strided_slice %0 {offsets = [6, 0, 0], sizes = [1, 32, 64], strides = [1, 1, 1]} : vector<9x32x64xbf16> to vector<1x32x64xbf16>
    %241 = vector.shape_cast %240 : vector<1x32x64xbf16> to vector<32x64xbf16>
    %cst_59 = arith.constant dense<0.000000e+00> : vector<4x64xf32>
    %242 = tpu.matmul %239, %241, %cst_59 {dimension_numbers = #tpu.dot_dimension_numbers<[1], [0], [0], [1], [0, 0, 1, 1], [], []>} : vector<4x32xbf16>, vector<32x64xbf16>, vector<4x64xf32> -> vector<4x64xf32>
    %243 = arith.addf %237, %242 : vector<4x64xf32>
    %244 = vector.extract_strided_slice %200 {offsets = [2, 1, 0], sizes = [1, 4, 32], strides = [1, 1, 1]} : vector<3x6x32xbf16> to vector<1x4x32xbf16>
    %245 = vector.shape_cast %244 : vector<1x4x32xbf16> to vector<4x32xbf16>
    %246 = vector.extract_strided_slice %0 {offsets = [7, 0, 0], sizes = [1, 32, 64], strides = [1, 1, 1]} : vector<9x32x64xbf16> to vector<1x32x64xbf16>
    %247 = vector.shape_cast %246 : vector<1x32x64xbf16> to vector<32x64xbf16>
    %cst_60 = arith.constant dense<0.000000e+00> : vector<4x64xf32>
    %248 = tpu.matmul %245, %247, %cst_60 {dimension_numbers = #tpu.dot_dimension_numbers<[1], [0], [0], [1], [0, 0, 1, 1], [], []>} : vector<4x32xbf16>, vector<32x64xbf16>, vector<4x64xf32> -> vector<4x64xf32>
    %249 = arith.addf %243, %248 : vector<4x64xf32>
    %250 = vector.extract_strided_slice %200 {offsets = [2, 2, 0], sizes = [1, 4, 32], strides = [1, 1, 1]} : vector<3x6x32xbf16> to vector<1x4x32xbf16>
    %251 = vector.shape_cast %250 : vector<1x4x32xbf16> to vector<4x32xbf16>
    %252 = vector.extract_strided_slice %0 {offsets = [8, 0, 0], sizes = [1, 32, 64], strides = [1, 1, 1]} : vector<9x32x64xbf16> to vector<1x32x64xbf16>
    %253 = vector.shape_cast %252 : vector<1x32x64xbf16> to vector<32x64xbf16>
    %cst_61 = arith.constant dense<0.000000e+00> : vector<4x64xf32>
    %254 = tpu.matmul %251, %253, %cst_61 {dimension_numbers = #tpu.dot_dimension_numbers<[1], [0], [0], [1], [0, 0, 1, 1], [], []>} : vector<4x32xbf16>, vector<32x64xbf16>, vector<4x64xf32> -> vector<4x64xf32>
    %255 = arith.addf %249, %254 : vector<4x64xf32>
    %256 = vector.broadcast %1 : vector<1x64xf32> to vector<4x64xf32>
    %257 = arith.addf %255, %256 : vector<4x64xf32>
    %cst_62 = arith.constant 0.000000e+00 : f32
    %258 = vector.broadcast %cst_62 : f32 to vector<4x64xf32>
    %259 = arith.maximumf %257, %258 : vector<4x64xf32>
    %cst_63 = arith.constant dense<0.000000e+00> : vector<64xf32>
    %260 = vector.multi_reduction <add>, %259, %cst_63 [0] : vector<4x64xf32> to vector<64xf32>
    %261 = vector.shape_cast %260 : vector<64xf32> to vector<1x64xf32>
    %262 = arith.addf %197, %261 : vector<1x64xf32>
    %c4_i32 = arith.constant 4 : i32
    %cst_64 = arith.constant 6.250000e-02 : f32
    %263 = vector.broadcast %cst_64 : f32 to vector<1x64xf32>
    %264 = arith.mulf %262, %263 : vector<1x64xf32>
    %265 = vector.shape_cast %264 : vector<1x64xf32> to vector<1x1x64xf32>
    %c0_65 = arith.constant 0 : index
    %c0_66 = arith.constant 0 : index
    %c0_67 = arith.constant 0 : index
    %266 = vector.load %arg4[%c0_65, %c0_66, %c0_67] : memref<1x1x64xf32, #tpu.memory_space<vmem>>, vector<1x1x64xf32>
    tpu.vector_store %arg4[%c0_65, %c0_66, %c0_67], %265 {strides = array<i32>} : memref<1x1x64xf32, #tpu.memory_space<vmem>>, vector<1x1x64xf32>,
    return
  }
  func.func @transform_0(%arg0: i32) -> (i32, i32, i32, i32) {
    %c0_i32 = arith.constant 0 : i32
    %c0_i32_0 = arith.constant 0 : i32
    %c0_i32_1 = arith.constant 0 : i32
    %c0_i32_2 = arith.constant 0 : i32
    return %arg0, %c0_i32, %c0_i32_0, %c0_i32_1 : i32, i32, i32, i32
  }
  func.func @transform_1(%arg0: i32) -> (i32, i32, i32) {
    %c0_i32 = arith.constant 0 : i32
    %c0_i32_0 = arith.constant 0 : i32
    %c0_i32_1 = arith.constant 0 : i32
    %c0_i32_2 = arith.constant 0 : i32
    return %c0_i32, %c0_i32_0, %c0_i32_1 : i32, i32, i32
  }
  func.func @transform_2(%arg0: i32) -> (i32, i32) {
    %c0_i32 = arith.constant 0 : i32
    %c0_i32_0 = arith.constant 0 : i32
    %c0_i32_1 = arith.constant 0 : i32
    return %c0_i32, %c0_i32_0 : i32, i32
  }
  func.func @transform_3(%arg0: i32) -> (i32, i32, i32) {
    %c0_i32 = arith.constant 0 : i32
    %c0_i32_0 = arith.constant 0 : i32
    %c0_i32_1 = arith.constant 0 : i32
    return %arg0, %c0_i32, %c0_i32_0 : i32, i32, i32
  }
}

</mosaic_0001>

<llo_original>
// kernel: image_encoder_forward.2
$region0: #{image_encoder_forward.2}
  #allocation0 [shape = 'u32[]', space=smem, size = 0x4, offset = 0x4, fixed_abs, tag = 'smem constant byte address 0x4 - core index']
  #allocation1 [shape = 'u32[144,128]{1,0:T(1,128)}', space=vmem, size = 0x12000, scoped, tag = 'internal scratch']
  %s0 = inlined_call_operand.vmem [shape: f32[8,192], index: 0, kind: input, shape index: {}]
  %s1 = inlined_call_operand.vmem [shape: f32[192,128], index: 1, kind: input, shape index: {}]
  %s2 = inlined_call_operand.vmem [shape: f32[1,128], index: 2, kind: input, shape index: {}]
  %s3 = inlined_call_operand.vmem [shape: bf16[8,128], index: 3, kind: output, shape index: {}]
  %s4 = sld [smem:[#allocation0]]
  $region22: #{image_encoder_forward.2} parent=0
    _
  %s6 = ssub.s32 1, %s4
  %s7 = scalar_select 0, %s6, %s4
  // Predicated region
  $region2: #{image_encoder_forward.2} parent=0 // pred_check
    _
  $region3: #{image_encoder_forward.2} parent=0 // pred_check_branch
    %9 = sbr.rel (0) target = $region5
  $region4: #{image_encoder_forward.2} parent=0 // pred_region
    _
  $region5: #{image_encoder_forward.2} parent=0 // pred_fallthru
    _
  // Predicated region
  $region6: #{image_encoder_forward.2} parent=0 // pred_check
    _
  $region7: #{image_encoder_forward.2} parent=0 // pred_check_branch
    %11 = sbr.rel (0) target = $region9
  $region8: #{image_encoder_forward.2} parent=0 // pred_region
    _
  $region9: #{image_encoder_forward.2} parent=0 // pred_fallthru
    _
  // Predicated region
  $region10: #{image_encoder_forward.2} parent=0 // pred_check
    _
  $region11: #{image_encoder_forward.2} parent=0 // pred_check_branch
    %13 = sbr.rel (0) target = $region13
  $region12: #{image_encoder_forward.2} parent=0 // pred_region
    _
  $region13: #{image_encoder_forward.2} parent=0 // pred_fallthru
    _
  %v14 = vld [vmem:[%s0] sm:$0xff]
  %v15 = vld [vmem:[%s0 + $0x8] sm:$0xff]
  %v16 = vld [vmem:[%s1] sm:$0xff]
  %v17 = vld [vmem:[%s1 + $0x8] sm:$0xff]
  %v18 = vld [vmem:[%s1 + $0x10] sm:$0xff]
  %v19 = vld [vmem:[%s1 + $0x18] sm:$0xff]
  %v20 = vld [vmem:[%s1 + $0x20] sm:$0xff]
  %v21 = vld [vmem:[%s1 + $0x28] sm:$0xff]
  %v22 = vld [vmem:[%s1 + $0x30] sm:$0xff]
  %v23 = vld [vmem:[%s1 + $0x38] sm:$0xff]
  %v24 = vld [vmem:[%s1 + $0x40] sm:$0xff]
  %v25 = vld [vmem:[%s1 + $0x48] sm:$0xff]
  %v26 = vld [vmem:[%s1 + $0x50] sm:$0xff]
  %v27 = vld [vmem:[%s1 + $0x58] sm:$0xff]
  %v28 = vld [vmem:[%s1 + $0x60] sm:$0xff]
  %v29 = vld [vmem:[%s1 + $0x68] sm:$0xff]
  %v30 = vld [vmem:[%s1 + $0x70] sm:$0xff]
  %v31 = vld [vmem:[%s1 + $0x78] sm:$0xff]
  %v32 = vld [vmem:[%s1 + $0x80] sm:$0xff]
  %v33 = vld [vmem:[%s1 + $0x88] sm:$0xff]
  %v34 = vld [vmem:[%s1 + $0x90] sm:$0xff]
  %v35 = vld [vmem:[%s1 + $0x98] sm:$0xff]
  %v36 = vld [vmem:[%s1 + $0xa0] sm:$0xff]
  %v37 = vld [vmem:[%s1 + $0xa8] sm:$0xff]
  %v38 = vld [vmem:[%s1 + $0xb0] sm:$0xff]
  %v39 = vld [vmem:[%s1 + $0xb8] sm:$0xff]
  %v40 = vld [vmem:[%s2] sm:$0x1]
  %v42 = vlaneseq
  %v43 = vshrl.u32 %v42, 7
  %v44 = vsub.s32 0, %v43
  %v45 = vrot.slane %v40, %v44
  %vm47 = vcmask 523264
  %v49 = vsel %vm47, %v15, 0
  %51 = vmatprep.subr.mxu0 0.0
  %52 = vmatpush1.msra.mxu0 %v31
  %53 = vmatprep.subr.mxu0 0.0
  %54 = vmatpush1.msra.mxu0 %v30
  %55 = vmatprep.subr.mxu0 0.0
  %56 = vmatpush1.msra.mxu0 %v29
  %57 = vmatprep.subr.mxu0 0.0
  %58 = vmatpush1.msra.mxu0 %v28
  %59 = vmatprep.subr.mxu0 0.0
  %60 = vmatpush1.msra.mxu0 %v27
  %61 = vmatprep.subr.mxu0 0.0
  %62 = vmatpush1.msra.mxu0 %v26
  %63 = vmatprep.subr.mxu0 0.0
  %64 = vmatpush1.msra.mxu0 %v25
  %65 = vmatprep.subr.mxu0 0.0
  %66 = vmatpush1.msra.mxu0 %v24
  %67 = vmatprep.subr.mxu0 0.0
  %68 = vmatpush1.msra.mxu0 %v23
  %69 = vmatprep.subr.mxu0 0.0
  %70 = vmatpush1.msra.mxu0 %v22
  %71 = vmatprep.subr.mxu0 0.0
  %72 = vmatpush1.msra.mxu0 %v21
  %73 = vmatprep.subr.mxu0 0.0
  %74 = vmatpush1.msra.mxu0 %v20
  %75 = vmatprep.subr.mxu0 0.0
  %76 = vmatpush1.msra.mxu0 %v19
  %77 = vmatprep.subr.mxu0 0.0
  %78 = vmatpush1.msra.mxu0 %v18
  %79 = vmatprep.subr.mxu0 0.0
  %80 = vmatpush1.msra.mxu0 %v17
  %81 = vmatprep.subr.mxu0 0.0
  %82 = vmatpush1.msra.mxu0 %v16
  %83 = vmatprep.subr.mxu0 0.0
  %84 = vmatpush2.msra.mxu0 0.0
  %85 = vmatprep.subr.mxu0 0.0
  %86 = vmatpush2.msra.mxu0 0.0
  %87 = vmatprep.subr.mxu0 0.0
  %88 = vmatpush2.msra.mxu0 0.0
  %89 = vmatprep.subr.mxu0 0.0
  %90 = vmatpush2.msra.mxu0 0.0
  %91 = vmatprep.subr.mxu0 0.0
  %92 = vmatpush2.msra.mxu0 0.0
  %93 = vmatprep.subr.mxu0 0.0
  %94 = vmatpush2.msra.mxu0 0.0
  %95 = vmatprep.subr.mxu0 0.0
  %96 = vmatpush2.msra.mxu0 0.0
  %97 = vmatprep.subr.mxu0 0.0
  %98 = vmatpush2.msra.mxu0 0.0
  %99 = vmatprep.subr.mxu0 0.0
  %100 = vmatpush2.msra.mxu0 %v39
  %101 = vmatprep.subr.mxu0 0.0
  %102 = vmatpush2.msra.mxu0 %v38
  %103 = vmatprep.subr.mxu0 0.0
  %104 = vmatpush2.msra.mxu0 %v37
  %105 = vmatprep.subr.mxu0 0.0
  %106 = vmatpush2.msra.mxu0 %v36
  %107 = vmatprep.subr.mxu0 0.0
  %108 = vmatpush2.msra.mxu0 %v35
  %109 = vmatprep.subr.mxu0 0.0
  %110 = vmatpush2.msra.mxu0 %v34
  %111 = vmatprep.subr.mxu0 0.0
  %112 = vmatpush2.msra.mxu0 %v33
  %113 = vmatprep.subr.mxu0 0.0
  %114 = vmatpush2.msra.mxu0 %v32
  %115 = vmatprep.mubr.f32.mxu0 %v49
  %116 = vmatmul.mubr.f32.gmra.mxu0 %v14
  %v117 = vpop.f32.mrf.mxu0
  %v118 = vadd.f32 %v45, %v117
  %v119 = vpop.f32.mrf.mxu0
  %120 = vdwg.mxu0
  %v121 = vmax.f32 %v118, 0.0
  %v122 = vpack.c.bf16 %v121, %v121
  %123 = vst [vmem:[%s3] sm:$0xf] %v122
  // Predicated region
  $region14: #{image_encoder_forward.2} parent=0 // pred_check
    _
  $region15: #{image_encoder_forward.2} parent=0 // pred_check_branch
    %125 = sbr.rel (0) target = $region17
  $region16: #{image_encoder_forward.2} parent=0 // pred_region
    _
  $region17: #{image_encoder_forward.2} parent=0 // pred_fallthru
    _
  // Predicated region
  $region18: #{image_encoder_forward.2} parent=0 // pred_check
    _
  $region19: #{image_encoder_forward.2} parent=0 // pred_check_branch
    %127 = sbr.rel (0) target = $region21
  $region20: #{image_encoder_forward.2} parent=0 // pred_region
    _
  $region21: #{image_encoder_forward.2} parent=0 // pred_fallthru
    _

// kernel: image_encoder_forward.3
$region0: #{image_encoder_forward.3}
  #allocation0 [shape = 'u32[]', space=smem, size = 0x4, offset = 0x4, fixed_abs, tag = 'smem constant byte address 0x4 - core index']
  #allocation1 [shape = 'u32[144,128]{1,0:T(1,128)}', space=vmem, size = 0x12000, scoped, tag = 'internal scratch']
  %s0 = inlined_call_operand.vmem [shape: bf16[2,6,6,32], index: 0, kind: input, shape index: {}]
  %s1 = inlined_call_operand.vmem [shape: bf16[9,32,64], index: 1, kind: input, shape index: {}]
  %s2 = inlined_call_operand.vmem [shape: f32[1,64], index: 2, kind: input, shape index: {}]
  %s3 = inlined_call_operand.hbm [shape: f32[2,1,64], index: 3, kind: output, shape index: {}]
  %s4 = sld [smem:[#allocation0]]
  $region45: #{image_encoder_forward.3} parent=0
    _
  %s6 = ssub.s32 1, %s4
  %s7 = scalar_select 0, %s6, %s4
  $region1: #{image_encoder_forward.3} parent=0
    #allocation2 [shape = 'u8[1024]{0}', space=vmem, size = 0x400, scoped, tag = 'output window, operand 0']
    #allocation3 [shape = 's32[2]{0}', space=sflag, size = 0x8, scoped, tag = 'scoped memory for image_encoder_forward.3']
    %8 = vsyncpa [#allocation3], 0
    %s9 = scalar_lea.sflag [#allocation3], 1
    %10 = vsyncpa %s9, 0
    loop: start=0, step=1, limit=4
    $region2: #{image_encoder_forward.3} parent=1 // loop_pre_header
      _
    $region3: #{image_encoder_forward.3} parent=1 // loop_header
      %s12 = sphi 0, %s16
      %p13 = scmp.ge.s32.totalorder %s12, 4
      %s22 = sphi 0, %s24
      %s25 = sphi 0, %s22
      %s26 = sphi 0, %s25
      %s42 = sphi 0, %s26
      %s46 = sphi 0, %s46
      %s48 = sphi 0, %s46
      %s49 = sphi 0, %s48
      %s63 = sphi 0, %s49
      %s67 = sphi 0, %s67
      %s69 = sphi 0, %s67
      %s70 = sphi 0, %s69
      %s84 = sphi 0, %s70
      %s90 = sphi 0, %s92
      %s93 = sphi 0, %s90
      %s94 = sphi 0, %s93
      %s110 = sphi 0, %s94
    $region4: #{image_encoder_forward.3} parent=1 // loop_header_branch
      %15 = sbr.rel (%p13) target = $region8
    $region5: #{image_encoder_forward.3} parent=1 // loop_body
      %s17 = ssub.s32 %s12, 1
      %s18 = ssub.s32 %s12, 2
      %s19 = sadd.s32 %s12, 1
      %s20 = ssub.s32 %s12, %s19
      %p21 = scmp.eq.s32.totalorder %s20, 0
      %s23 = sadd.s32 %s22, 1
      %s24 = scalar_select %p21, %s22, %s23
      %p27 = pneg %p21
      %p28 = scmp.eq.s32.totalorder %s12, 1
      %p29 = por %p27, %p28
      %p30 = scmp.ne.s32.totalorder %s22, %s25
      %p31 = scmp.eq.s32.totalorder %s12, 0
      %p32 = por %p30, %p31
      %p33 = scmp.ne.s32.totalorder %s22, %s25
      %p34 = scmp.eq.s32.totalorder %s17, 1
      %p35 = por %p33, %p34
      %p36 = scmp.ne.s32.totalorder %s25, %s26
      %p37 = scmp.eq.s32.totalorder %s17, 0
      %p38 = por %p36, %p37
      %p39 = scmp.ne.s32.totalorder %s25, %s26
      %p40 = scmp.eq.s32.totalorder %s18, 1
      %p41 = por %p39, %p40
      %p43 = scmp.ne.s32.totalorder %s26, %s42
      %p44 = scmp.eq.s32.totalorder %s18, 0
      %p45 = por %p43, %p44
      %s47 = sadd.s32 %s46, 1
      %p50 = scmp.eq.s32.totalorder %s12, 1
      %p51 = scmp.ne.s32.totalorder %s46, %s48
      %p52 = scmp.eq.s32.totalorder %s12, 0
      %p53 = por %p51, %p52
      %p54 = scmp.ne.s32.totalorder %s46, %s48
      %p55 = scmp.eq.s32.totalorder %s17, 1
      %p56 = por %p54, %p55
      %p57 = scmp.ne.s32.totalorder %s48, %s49
      %p58 = scmp.eq.s32.totalorder %s17, 0
      %p59 = por %p57, %p58
      %p60 = scmp.ne.s32.totalorder %s48, %s49
      %p61 = scmp.eq.s32.totalorder %s18, 1
      %p62 = por %p60, %p61
      %p64 = scmp.ne.s32.totalorder %s49, %s63
      %p65 = scmp.eq.s32.totalorder %s18, 0
      %p66 = por %p64, %p65
      %s68 = sadd.s32 %s67, 1
      %p71 = scmp.eq.s32.totalorder %s12, 1
      %p72 = scmp.ne.s32.totalorder %s67, %s69
      %p73 = scmp.eq.s32.totalorder %s12, 0
      %p74 = por %p72, %p73
      %p75 = scmp.ne.s32.totalorder %s67, %s69
      %p76 = scmp.eq.s32.totalorder %s17, 1
      %p77 = por %p75, %p76
      %p78 = scmp.ne.s32.totalorder %s69, %s70
      %p79 = scmp.eq.s32.totalorder %s17, 0
      %p80 = por %p78, %p79
      %p81 = scmp.ne.s32.totalorder %s69, %s70
      %p82 = scmp.eq.s32.totalorder %s18, 1
      %p83 = por %p81, %p82
      %p85 = scmp.ne.s32.totalorder %s70, %s84
      %p86 = scmp.eq.s32.totalorder %s18, 0
      %p87 = por %p85, %p86
      %s88 = ssub.s32 %s12, %s19
      %p89 = scmp.eq.s32.totalorder %s88, 0
      %s91 = sadd.s32 %s90, 1
      %s92 = scalar_select %p89, %s90, %s91
      %p95 = pneg %p89
      %p96 = scmp.eq.s32.totalorder %s12, 1
      %p97 = por %p95, %p96
      %p98 = scmp.ne.s32.totalorder %s90, %s93
      %p99 = scmp.eq.s32.totalorder %s12, 0
      %p100 = por %p98, %p99
      %p101 = scmp.ne.s32.totalorder %s90, %s93
      %p102 = scmp.eq.s32.totalorder %s17, 1
      %p103 = por %p101, %p102
      %p104 = scmp.ne.s32.totalorder %s93, %s94
      %p105 = scmp.eq.s32.totalorder %s17, 0
      %p106 = por %p104, %p105
      %p107 = scmp.ne.s32.totalorder %s93, %s94
      %p108 = scmp.eq.s32.totalorder %s18, 1
      %p109 = por %p107, %p108
      %p111 = scmp.ne.s32.totalorder %s94, %s110
      %p112 = scmp.eq.s32.totalorder %s18, 0
      %p113 = por %p111, %p112
      %p114 = scmp.le.s32.totalorder 1, %s12
      %p115 = scmp.lt.s32.totalorder %s12, 3
      %p116 = pnand %p114, %p115
      %p117 = pneg %p116
      // Predicated region
      $region9: #{image_encoder_forward.3} parent=5 // pred_check
        _
      $region10: #{image_encoder_forward.3} parent=5 // pred_check_branch
        %119 = sbr.rel (%p116) target = $region12
      $region11: #{image_encoder_forward.3} parent=5 // pred_region
        %s120 = ssub.s32 %s12, 1
        // Predicated region
        $region13: #{image_encoder_forward.3} parent=11 // pred_check
          %p121 = pneg %p59
        $region14: #{image_encoder_forward.3} parent=11 // pred_check_branch
          %123 = sbr.rel (%p121) target = $region16
        $region15: #{image_encoder_forward.3} parent=11 // pred_region
          _
        $region16: #{image_encoder_forward.3} parent=11 // pred_fallthru
          _
        // Predicated region
        $region17: #{image_encoder_forward.3} parent=11 // pred_check
          %p124 = pneg %p80
        $region18: #{image_encoder_forward.3} parent=11 // pred_check_branch
          %126 = sbr.rel (%p124) target = $region20
        $region19: #{image_encoder_forward.3} parent=11 // pred_region
          _
        $region20: #{image_encoder_forward.3} parent=11 // pred_fallthru
          _
      $region12: #{image_encoder_forward.3} parent=5 // pred_fallthru
        _
      %p127 = scmp.lt.s32.totalorder %s12, 2
      // Predicated region
      $region21: #{image_encoder_forward.3} parent=5 // pred_check
        %p128 = pneg %p127
      $region22: #{image_encoder_forward.3} parent=5 // pred_check_branch
        %130 = sbr.rel (%p128) target = $region24
      $region23: #{image_encoder_forward.3} parent=5 // pred_region
        // Predicated region
        $region25: #{image_encoder_forward.3} parent=23 // pred_check
          %p131 = pneg %p32
        $region26: #{image_encoder_forward.3} parent=23 // pred_check_branch
          %133 = sbr.rel (%p131) target = $region28
        $region27: #{image_encoder_forward.3} parent=23 // pred_region
          %p134 = scmp.lt.s32.totalorder %s12, 1
          %s135 = scalar_select %p134, %s12, 1
          %s136 = smul.addr %s135, 6
          %s137 = smul.addr %s136, 4
          %s138 = scalar_lea.vmem %s0, %s137
        $region28: #{image_encoder_forward.3} parent=23 // pred_fallthru
          _
      $region24: #{image_encoder_forward.3} parent=5 // pred_fallthru
        _
      %p139 = scmp.le.s32.totalorder 1, %s12
      %p140 = scmp.lt.s32.totalorder %s12, 3
      %p141 = pnand %p139, %p140
      %p142 = pneg %p141
      // Predicated region
      $region29: #{image_encoder_forward.3} parent=5 // pred_check
        _
      $region30: #{image_encoder_forward.3} parent=5 // pred_check_branch
        %144 = sbr.rel (%p141) target = $region32
      $region31: #{image_encoder_forward.3} parent=5 // pred_region
        %s145 = ssub.s32 %s12, 1
        %p146 = scmp.lt.s32.totalorder %s17, 1
        %s147 = scalar_select %p146, %s17, 1
        %s148 = smul.addr %s147, 6
        %s149 = smul.addr %s148, 4
        %s150 = scalar_lea.vmem %s0, %s149
        %p151 = pneg %p38
        %p152 = pneg %p35
        %p153 = pneg %p59
        %p154 = pneg %p56
        %p155 = pneg %p80
        %p156 = pneg %p77
        %p157 = pneg %p106
        %p158 = pneg %p103
        %s159 = sand.u32 %s93, 1
        %s160 = scalar_lea.sflag [#allocation3], %s159
        %s161 = sand.u32 %s93, 1
        %s162 = scalar_lea.vmem [#allocation2], %s161
        %p163 = scmp.lt.s32.totalorder %s17, 1
        %s164 = scalar_select %p163, %s17, 1
        %s165 = smul.addr %s164, 6
        %s166 = smul.addr %s165, 4
        %s167 = scalar_lea.vmem %s0, %s166
        %v169 = vld [vmem:[%s1] sm:$0xf]
        %v170 = vld [vmem:[%s1 + $0x4] sm:$0xf]
        %v171 = vld [vmem:[%s1 + $0x8] sm:$0xf]
        %v172 = vld [vmem:[%s1 + $0xc] sm:$0xf]
        %v173 = vld [vmem:[%s1 + $0x10] sm:$0xf]
        %v174 = vld [vmem:[%s1 + $0x14] sm:$0xf]
        %v175 = vld [vmem:[%s1 + $0x18] sm:$0xf]
        %v176 = vld [vmem:[%s1 + $0x1c] sm:$0xf]
        %v177 = vld [vmem:[%s1 + $0x20] sm:$0xf]
        %v178 = vld [vmem:[%s1 + $0x24] sm:$0xf]
        %v179 = vld [vmem:[%s1 + $0x28] sm:$0xf]
        %v180 = vld [vmem:[%s1 + $0x2c] sm:$0xf]
        %v181 = vld [vmem:[%s1 + $0x30] sm:$0xf]
        %v182 = vld [vmem:[%s1 + $0x34] sm:$0xf]
        %v183 = vld [vmem:[%s1 + $0x38] sm:$0xf]
        %v184 = vld [vmem:[%s1 + $0x3c] sm:$0xf]
        %v185 = vld [vmem:[%s1 + $0x40] sm:$0xf]
        %v186 = vld [vmem:[%s1 + $0x44] sm:$0xf]
        %v187 = vld [vmem:[%s1 + $0x48] sm:$0xf]
        %v188 = vld [vmem:[%s1 + $0x4c] sm:$0xf]
        %v189 = vld [vmem:[%s1 + $0x50] sm:$0xf]
        %v190 = vld [vmem:[%s1 + $0x54] sm:$0xf]
        %v191 = vld [vmem:[%s1 + $0x58] sm:$0xf]
        %v192 = vld [vmem:[%s1 + $0x5c] sm:$0xf]
        %v193 = vld [vmem:[%s1 + $0x60] sm:$0xf]
        %v194 = vld [vmem:[%s1 + $0x64] sm:$0xf]
        %v195 = vld [vmem:[%s1 + $0x68] sm:$0xf]
        %v196 = vld [vmem:[%s1 + $0x6c] sm:$0xf]
        %v197 = vld [vmem:[%s1 + $0x70] sm:$0xf]
        %v198 = vld [vmem:[%s1 + $0x74] sm:$0xf]
        %v199 = vld [vmem:[%s1 + $0x78] sm:$0xf]
        %v200 = vld [vmem:[%s1 + $0x7c] sm:$0xf]
        %v201 = vld [vmem:[%s1 + $0x80] sm:$0xf]
        %v202 = vld [vmem:[%s1 + $0x84] sm:$0xf]
        %v203 = vld [vmem:[%s1 + $0x88] sm:$0xf]
        %v204 = vld [vmem:[%s1 + $0x8c] sm:$0xf]
        %v205 = vld [vmem:[%s2] sm:$0x1]
        %v206 = vld [vmem:[%s167] sm:$0x7]
        %v207 = vld [vmem:[%s167 + $0x4] sm:$0x7]
        %v208 = vld [vmem:[%s167 + $0x8] sm:$0x7]
        %v210 = vunpack.c.l.b16 %v206
        %v211 = vpack.c.b16 %v210, %v210
        %v213 = vshrl.u32 %v211, 16
        %v215 = vshll.u32 %v211, 16
        %v217 = vrot.slane %v215, 1
        %v218 = vor.u32 %v213, %v217
        %v223 = vunpack.c.l.b16 %v173
        %v224 = vunpack.c.l.b16 %v174
        %v225 = vunpack.c.l.b16 %v175
        %v226 = vunpack.c.l.b16 %v176
        %v227 = vpack.c.b16 %v224, %v223
        %v228 = vpack.c.b16 %v226, %v225
        %vm231 = vcmask 261120
        %v233 = vsel %vm231, %v218, 0
        %235 = vmatprep.subr.bf16.mxu0 0
        %236 = vmatpush1.bf16.msra.mxu0 0
        %237 = vmatprep.subr.bf16.mxu0 0
        %238 = vmatpush1.bf16.msra.mxu0 0
        %239 = vmatprep.subr.bf16.mxu0 0
        %240 = vmatpush1.bf16.msra.mxu0 0
        %241 = vmatprep.subr.bf16.mxu0 0
        %242 = vmatpush1.bf16.msra.mxu0 0
        %243 = vmatprep.subr.bf16.mxu0 0
        %244 = vmatpush1.bf16.msra.mxu0 0
        %245 = vmatprep.subr.bf16.mxu0 0
        %246 = vmatpush1.bf16.msra.mxu0 0
        %247 = vmatprep.subr.bf16.mxu0 0
        %248 = vmatpush1.bf16.msra.mxu0 %v228
        %249 = vmatprep.subr.bf16.mxu0 0
        %250 = vmatpush1.bf16.msra.mxu0 %v227
        %251 = vmatprep.subr.bf16.mxu0 0
        %252 = vmatpush2.bf16.msra.mxu0 0
        %253 = vmatprep.subr.bf16.mxu0 0
        %254 = vmatpush2.bf16.msra.mxu0 0
        %255 = vmatprep.subr.bf16.mxu0 0
        %256 = vmatpush2.bf16.msra.mxu0 0
        %257 = vmatprep.subr.bf16.mxu0 0
        %258 = vmatpush2.bf16.msra.mxu0 0
        %259 = vmatprep.subr.bf16.mxu0 0
        %260 = vmatpush2.bf16.msra.mxu0 0
        %261 = vmatprep.subr.bf16.mxu0 0
        %262 = vmatpush2.bf16.msra.mxu0 0
        %263 = vmatprep.subr.bf16.mxu0 0
        %264 = vmatpush2.bf16.msra.mxu0 0
        %265 = vmatprep.subr.bf16.mxu0 0
        %266 = vmatpush2.bf16.msra.mxu0 0
        %267 = vmatprep.mubr.bf16.mxu0 0
        %268 = vmatmul.mubr.bf16.gmra.mxu0 %v233
        %v269 = vpop.f32.mrf.mxu0
        %v270 = vadd.f32 0.0, %v269
        %v271 = vpop.f32.mrf.mxu0
        %v272 = vpop.f32.mrf.mxu0
        %v273 = vpop.f32.mrf.mxu0
        %274 = vdwg.mxu0
        %v279 = vunpack.c.l.b16 %v169
        %v280 = vunpack.c.l.b16 %v170
        %v281 = vunpack.c.l.b16 %v171
        %v282 = vunpack.c.l.b16 %v172
        %v283 = vpack.c.b16 %v280, %v279
        %v284 = vpack.c.b16 %v282, %v281
        %v288 = vsel %vm231, %v206, 0
        %290 = vmatprep.subr.bf16.mxu0 0
        %291 = vmatpush1.bf16.msra.mxu0 0
        %292 = vmatprep.subr.bf16.mxu0 0
        %293 = vmatpush1.bf16.msra.mxu0 0
        %294 = vmatprep.subr.bf16.mxu0 0
        %295 = vmatpush1.bf16.msra.mxu0 0
        %296 = vmatprep.subr.bf16.mxu0 0
        %297 = vmatpush1.bf16.msra.mxu0 0
        %298 = vmatprep.subr.bf16.mxu0 0
        %299 = vmatpush1.bf16.msra.mxu0 0
        %300 = vmatprep.subr.bf16.mxu0 0
        %301 = vmatpush1.bf16.msra.mxu0 0
        %302 = vmatprep.subr.bf16.mxu0 0
        %303 = vmatpush1.bf16.msra.mxu0 %v284
        %304 = vmatprep.subr.bf16.mxu0 0
        %305 = vmatpush1.bf16.msra.mxu0 %v283
        %306 = vmatprep.subr.bf16.mxu0 0
        %307 = vmatpush2.bf16.msra.mxu0 0
        %308 = vmatprep.subr.bf16.mxu0 0
        %309 = vmatpush2.bf16.msra.mxu0 0
        %310 = vmatprep.subr.bf16.mxu0 0
        %311 = vmatpush2.bf16.msra.mxu0 0
        %312 = vmatprep.subr.bf16.mxu0 0
        %313 = vmatpush2.bf16.msra.mxu0 0
        %314 = vmatprep.subr.bf16.mxu0 0
        %315 = vmatpush2.bf16.msra.mxu0 0
        %316 = vmatprep.subr.bf16.mxu0 0
        %317 = vmatpush2.bf16.msra.mxu0 0
        %318 = vmatprep.subr.bf16.mxu0 0
        %319 = vmatpush2.bf16.msra.mxu0 0
        %320 = vmatprep.subr.bf16.mxu0 0
        %321 = vmatpush2.bf16.msra.mxu0 0
        %322 = vmatprep.mubr.bf16.mxu0 0
        %323 = vmatmul.mubr.bf16.gmra.mxu0 %v288
        %v324 = vpop.f32.mrf.mxu0
        %v325 = vadd.f32 %v270, %v324
        %v326 = vpop.f32.mrf.mxu0
        %v327 = vpop.f32.mrf.mxu0
        %v328 = vpop.f32.mrf.mxu0
        %329 = vdwg.mxu0
        %v330 = vrot.slane %v211, 1
        %v335 = vunpack.c.l.b16 %v177
        %v336 = vunpack.c.l.b16 %v178
        %v337 = vunpack.c.l.b16 %v179
        %v338 = vunpack.c.l.b16 %v180
        %v339 = vpack.c.b16 %v336, %v335
        %v340 = vpack.c.b16 %v338, %v337
        %v344 = vsel %vm231, %v330, 0
        %346 = vmatprep.subr.bf16.mxu0 0
        %347 = vmatpush1.bf16.msra.mxu0 0
        %348 = vmatprep.subr.bf16.mxu0 0
        %349 = vmatpush1.bf16.msra.mxu0 0
        %350 = vmatprep.subr.bf16.mxu0 0
        %351 = vmatpush1.bf16.msra.mxu0 0
        %352 = vmatprep.subr.bf16.mxu0 0
        %353 = vmatpush1.bf16.msra.mxu0 0
        %354 = vmatprep.subr.bf16.mxu0 0
        %355 = vmatpush1.bf16.msra.mxu0 0
        %356 = vmatprep.subr.bf16.mxu0 0
        %357 = vmatpush1.bf16.msra.mxu0 0
        %358 = vmatprep.subr.bf16.mxu0 0
        %359 = vmatpush1.bf16.msra.mxu0 %v340
        %360 = vmatprep.subr.bf16.mxu0 0
        %361 = vmatpush1.bf16.msra.mxu0 %v339
        %362 = vmatprep.subr.bf16.mxu0 0
        %363 = vmatpush2.bf16.msra.mxu0 0
        %364 = vmatprep.subr.bf16.mxu0 0
        %365 = vmatpush2.bf16.msra.mxu0 0
        %366 = vmatprep.subr.bf16.mxu0 0
        %367 = vmatpush2.bf16.msra.mxu0 0
        %368 = vmatprep.subr.bf16.mxu0 0
        %369 = vmatpush2.bf16.msra.mxu0 0
        %370 = vmatprep.subr.bf16.mxu0 0
        %371 = vmatpush2.bf16.msra.mxu0 0
        %372 = vmatprep.subr.bf16.mxu0 0
        %373 = vmatpush2.bf16.msra.mxu0 0
        %374 = vmatprep.subr.bf16.mxu0 0
        %375 = vmatpush2.bf16.msra.mxu0 0
        %376 = vmatprep.subr.bf16.mxu0 0
        %377 = vmatpush2.bf16.msra.mxu0 0
        %378 = vmatprep.mubr.bf16.mxu0 0
        %379 = vmatmul.mubr.bf16.gmra.mxu0 %v344
        %v380 = vpop.f32.mrf.mxu0
        %v381 = vadd.f32 0.0, %v380
        %v382 = vpop.f32.mrf.mxu0
        %v383 = vpop.f32.mrf.mxu0
        %v384 = vpop.f32.mrf.mxu0
        %385 = vdwg.mxu0
        %v386 = vadd.f32 %v325, %v381
        %v391 = vunpack.c.l.b16 %v181
        %v392 = vunpack.c.l.b16 %v182
        %v393 = vunpack.c.l.b16 %v183
        %v394 = vunpack.c.l.b16 %v184
        %v395 = vpack.c.b16 %v392, %v391
        %v396 = vpack.c.b16 %v394, %v393
        %v400 = vsel %vm231, %v207, 0
        %402 = vmatprep.subr.bf16.mxu0 0
        %403 = vmatpush1.bf16.msra.mxu0 0
        %404 = vmatprep.subr.bf16.mxu0 0
        %405 = vmatpush1.bf16.msra.mxu0 0
        %406 = vmatprep.subr.bf16.mxu0 0
        %407 = vmatpush1.bf16.msra.mxu0 0
        %408 = vmatprep.subr.bf16.mxu0 0
        %409 = vmatpush1.bf16.msra.mxu0 0
        %410 = vmatprep.subr.bf16.mxu0 0
        %411 = vmatpush1.bf16.msra.mxu0 0
        %412 = vmatprep.subr.bf16.mxu0 0
        %413 = vmatpush1.bf16.msra.mxu0 0
        %414 = vmatprep.subr.bf16.mxu0 0
        %415 = vmatpush1.bf16.msra.mxu0 %v396
        %416 = vmatprep.subr.bf16.mxu0 0
        %417 = vmatpush1.bf16.msra.mxu0 %v395
        %418 = vmatprep.subr.bf16.mxu0 0
        %419 = vmatpush2.bf16.msra.mxu0 0
        %420 = vmatprep.subr.bf16.mxu0 0
        %421 = vmatpush2.bf16.msra.mxu0 0
        %422 = vmatprep.subr.bf16.mxu0 0
        %423 = vmatpush2.bf16.msra.mxu0 0
        %424 = vmatprep.subr.bf16.mxu0 0
        %425 = vmatpush2.bf16.msra.mxu0 0
        %426 = vmatprep.subr.bf16.mxu0 0
        %427 = vmatpush2.bf16.msra.mxu0 0
        %428 = vmatprep.subr.bf16.mxu0 0
        %429 = vmatpush2.bf16.msra.mxu0 0
        %430 = vmatprep.subr.bf16.mxu0 0
        %431 = vmatpush2.bf16.msra.mxu0 0
        %432 = vmatprep.subr.bf16.mxu0 0
        %433 = vmatpush2.bf16.msra.mxu0 0
        %434 = vmatprep.mubr.bf16.mxu0 0
        %435 = vmatmul.mubr.bf16.gmra.mxu0 %v400
        %v436 = vpop.f32.mrf.mxu0
        %v437 = vadd.f32 0.0, %v436
        %v438 = vpop.f32.mrf.mxu0
        %v439 = vpop.f32.mrf.mxu0
        %v440 = vpop.f32.mrf.mxu0
        %441 = vdwg.mxu0
        %v442 = vadd.f32 %v386, %v437
        %v444 = vunpack.c.l.b16 %v207
        %v445 = vpack.c.b16 %v444, %v444
        %v447 = vshrl.u32 %v445, 16
        %v449 = vshll.u32 %v445, 16
        %v451 = vrot.slane %v449, 1
        %v452 = vor.u32 %v447, %v451
        %v457 = vunpack.c.l.b16 %v185
        %v458 = vunpack.c.l.b16 %v186
        %v459 = vunpack.c.l.b16 %v187
        %v460 = vunpack.c.l.b16 %v188
        %v461 = vpack.c.b16 %v458, %v457
        %v462 = vpack.c.b16 %v460, %v459
        %v466 = vsel %vm231, %v452, 0
        %468 = vmatprep.subr.bf16.mxu0 0
        %469 = vmatpush1.bf16.msra.mxu0 0
        %470 = vmatprep.subr.bf16.mxu0 0
        %471 = vmatpush1.bf16.msra.mxu0 0
        %472 = vmatprep.subr.bf16.mxu0 0
        %473 = vmatpush1.bf16.msra.mxu0 0
        %474 = vmatprep.subr.bf16.mxu0 0
        %475 = vmatpush1.bf16.msra.mxu0 0
        %476 = vmatprep.subr.bf16.mxu0 0
        %477 = vmatpush1.bf16.msra.mxu0 0
        %478 = vmatprep.subr.bf16.mxu0 0
        %479 = vmatpush1.bf16.msra.mxu0 0
        %480 = vmatprep.subr.bf16.mxu0 0
        %481 = vmatpush1.bf16.msra.mxu0 %v462
        %482 = vmatprep.subr.bf16.mxu0 0
        %483 = vmatpush1.bf16.msra.mxu0 %v461
        %484 = vmatprep.subr.bf16.mxu0 0
        %485 = vmatpush2.bf16.msra.mxu0 0
        %486 = vmatprep.subr.bf16.mxu0 0
        %487 = vmatpush2.bf16.msra.mxu0 0
        %488 = vmatprep.subr.bf16.mxu0 0
        %489 = vmatpush2.bf16.msra.mxu0 0
        %490 = vmatprep.subr.bf16.mxu0 0
        %491 = vmatpush2.bf16.msra.mxu0 0
        %492 = vmatprep.subr.bf16.mxu0 0
        %493 = vmatpush2.bf16.msra.mxu0 0
        %494 = vmatprep.subr.bf16.mxu0 0
        %495 = vmatpush2.bf16.msra.mxu0 0
        %496 = vmatprep.subr.bf16.mxu0 0
        %497 = vmatpush2.bf16.msra.mxu0 0
        %498 = vmatprep.subr.bf16.mxu0 0
        %499 = vmatpush2.bf16.msra.mxu0 0
        %500 = vmatprep.mubr.bf16.mxu0 0
        %501 = vmatmul.mubr.bf16.gmra.mxu0 %v466
        %v502 = vpop.f32.mrf.mxu0
        %v503 = vadd.f32 0.0, %v502
        %v504 = vpop.f32.mrf.mxu0
        %v505 = vpop.f32.mrf.mxu0
        %v506 = vpop.f32.mrf.mxu0
        %507 = vdwg.mxu0
        %v508 = vadd.f32 %v442, %v503
        %v509 = vrot.slane %v445, 1
        %v514 = vunpack.c.l.b16 %v189
        %v515 = vunpack.c.l.b16 %v190
        %v516 = vunpack.c.l.b16 %v191
        %v517 = vunpack.c.l.b16 %v192
        %v518 = vpack.c.b16 %v515, %v514
        %v519 = vpack.c.b16 %v517, %v516
        %v523 = vsel %vm231, %v509, 0
        %525 = vmatprep.subr.bf16.mxu0 0
        %526 = vmatpush1.bf16.msra.mxu0 0
        %527 = vmatprep.subr.bf16.mxu0 0
        %528 = vmatpush1.bf16.msra.mxu0 0
        %529 = vmatprep.subr.bf16.mxu0 0
        %530 = vmatpush1.bf16.msra.mxu0 0
        %531 = vmatprep.subr.bf16.mxu0 0
        %532 = vmatpush1.bf16.msra.mxu0 0
        %533 = vmatprep.subr.bf16.mxu0 0
        %534 = vmatpush1.bf16.msra.mxu0 0
        %535 = vmatprep.subr.bf16.mxu0 0
        %536 = vmatpush1.bf16.msra.mxu0 0
        %537 = vmatprep.subr.bf16.mxu0 0
        %538 = vmatpush1.bf16.msra.mxu0 %v519
        %539 = vmatprep.subr.bf16.mxu0 0
        %540 = vmatpush1.bf16.msra.mxu0 %v518
        %541 = vmatprep.subr.bf16.mxu0 0
        %542 = vmatpush2.bf16.msra.mxu0 0
        %543 = vmatprep.subr.bf16.mxu0 0
        %544 = vmatpush2.bf16.msra.mxu0 0
        %545 = vmatprep.subr.bf16.mxu0 0
        %546 = vmatpush2.bf16.msra.mxu0 0
        %547 = vmatprep.subr.bf16.mxu0 0
        %548 = vmatpush2.bf16.msra.mxu0 0
        %549 = vmatprep.subr.bf16.mxu0 0
        %550 = vmatpush2.bf16.msra.mxu0 0
        %551 = vmatprep.subr.bf16.mxu0 0
        %552 = vmatpush2.bf16.msra.mxu0 0
        %553 = vmatprep.subr.bf16.mxu0 0
        %554 = vmatpush2.bf16.msra.mxu0 0
        %555 = vmatprep.subr.bf16.mxu0 0
        %556 = vmatpush2.bf16.msra.mxu0 0
        %557 = vmatprep.mubr.bf16.mxu0 0
        %558 = vmatmul.mubr.bf16.gmra.mxu0 %v523
        %v559 = vpop.f32.mrf.mxu0
        %v560 = vadd.f32 0.0, %v559
        %v561 = vpop.f32.mrf.mxu0
        %v562 = vpop.f32.mrf.mxu0
        %v563 = vpop.f32.mrf.mxu0
        %564 = vdwg.mxu0
        %v565 = vadd.f32 %v508, %v560
        %v570 = vunpack.c.l.b16 %v193
        %v571 = vunpack.c.l.b16 %v194
        %v572 = vunpack.c.l.b16 %v195
        %v573 = vunpack.c.l.b16 %v196
        %v574 = vpack.c.b16 %v571, %v570
        %v575 = vpack.c.b16 %v573, %v572
        %v579 = vsel %vm231, %v208, 0
        %581 = vmatprep.subr.bf16.mxu0 0
        %582 = vmatpush1.bf16.msra.mxu0 0
        %583 = vmatprep.subr.bf16.mxu0 0
        %584 = vmatpush1.bf16.msra.mxu0 0
        %585 = vmatprep.subr.bf16.mxu0 0
        %586 = vmatpush1.bf16.msra.mxu0 0
        %587 = vmatprep.subr.bf16.mxu0 0
        %588 = vmatpush1.bf16.msra.mxu0 0
        %589 = vmatprep.subr.bf16.mxu0 0
        %590 = vmatpush1.bf16.msra.mxu0 0
        %591 = vmatprep.subr.bf16.mxu0 0
        %592 = vmatpush1.bf16.msra.mxu0 0
        %593 = vmatprep.subr.bf16.mxu0 0
        %594 = vmatpush1.bf16.msra.mxu0 %v575
        %595 = vmatprep.subr.bf16.mxu0 0
        %596 = vmatpush1.bf16.msra.mxu0 %v574
        %597 = vmatprep.subr.bf16.mxu0 0
        %598 = vmatpush2.bf16.msra.mxu0 0
        %599 = vmatprep.subr.bf16.mxu0 0
        %600 = vmatpush2.bf16.msra.mxu0 0
        %601 = vmatprep.subr.bf16.mxu0 0
        %602 = vmatpush2.bf16.msra.mxu0 0
        %603 = vmatprep.subr.bf16.mxu0 0
        %604 = vmatpush2.bf16.msra.mxu0 0
        %605 = vmatprep.subr.bf16.mxu0 0
        %606 = vmatpush2.bf16.msra.mxu0 0
        %607 = vmatprep.subr.bf16.mxu0 0
        %608 = vmatpush2.bf16.msra.mxu0 0
        %609 = vmatprep.subr.bf16.mxu0 0
        %610 = vmatpush2.bf16.msra.mxu0 0
        %611 = vmatprep.subr.bf16.mxu0 0
        %612 = vmatpush2.bf16.msra.mxu0 0
        %613 = vmatprep.mubr.bf16.mxu0 0
        %614 = vmatmul.mubr.bf16.gmra.mxu0 %v579
        %v615 = vpop.f32.mrf.mxu0
        %v616 = vadd.f32 0.0, %v615
        %v617 = vpop.f32.mrf.mxu0
        %v618 = vpop.f32.mrf.mxu0
        %v619 = vpop.f32.mrf.mxu0
        %620 = vdwg.mxu0
        %v621 = vadd.f32 %v565, %v616
        %v623 = vunpack.c.l.b16 %v208
        %v624 = vpack.c.b16 %v623, %v623
        %v626 = vshrl.u32 %v624, 16
        %v628 = vshll.u32 %v624, 16
        %v630 = vrot.slane %v628, 1
        %v631 = vor.u32 %v626, %v630
        %v636 = vunpack.c.l.b16 %v197
        %v637 = vunpack.c.l.b16 %v198
        %v638 = vunpack.c.l.b16 %v199
        %v639 = vunpack.c.l.b16 %v200
        %v640 = vpack.c.b16 %v637, %v636
        %v641 = vpack.c.b16 %v639, %v638
        %v645 = vsel %vm231, %v631, 0
        %647 = vmatprep.subr.bf16.mxu0 0
        %648 = vmatpush1.bf16.msra.mxu0 0
        %649 = vmatprep.subr.bf16.mxu0 0
        %650 = vmatpush1.bf16.msra.mxu0 0
        %651 = vmatprep.subr.bf16.mxu0 0
        %652 = vmatpush1.bf16.msra.mxu0 0
        %653 = vmatprep.subr.bf16.mxu0 0
        %654 = vmatpush1.bf16.msra.mxu0 0
        %655 = vmatprep.subr.bf16.mxu0 0
        %656 = vmatpush1.bf16.msra.mxu0 0
        %657 = vmatprep.subr.bf16.mxu0 0
        %658 = vmatpush1.bf16.msra.mxu0 0
        %659 = vmatprep.subr.bf16.mxu0 0
        %660 = vmatpush1.bf16.msra.mxu0 %v641
        %661 = vmatprep.subr.bf16.mxu0 0
        %662 = vmatpush1.bf16.msra.mxu0 %v640
        %663 = vmatprep.subr.bf16.mxu0 0
        %664 = vmatpush2.bf16.msra.mxu0 0
        %665 = vmatprep.subr.bf16.mxu0 0
        %666 = vmatpush2.bf16.msra.mxu0 0
        %667 = vmatprep.subr.bf16.mxu0 0
        %668 = vmatpush2.bf16.msra.mxu0 0
        %669 = vmatprep.subr.bf16.mxu0 0
        %670 = vmatpush2.bf16.msra.mxu0 0
        %671 = vmatprep.subr.bf16.mxu0 0
        %672 = vmatpush2.bf16.msra.mxu0 0
        %673 = vmatprep.subr.bf16.mxu0 0
        %674 = vmatpush2.bf16.msra.mxu0 0
        %675 = vmatprep.subr.bf16.mxu0 0
        %676 = vmatpush2.bf16.msra.mxu0 0
        %677 = vmatprep.subr.bf16.mxu0 0
        %678 = vmatpush2.bf16.msra.mxu0 0
        %679 = vmatprep.mubr.bf16.mxu0 0
        %680 = vmatmul.mubr.bf16.gmra.mxu0 %v645
        %v681 = vpop.f32.mrf.mxu0
        %v682 = vadd.f32 0.0, %v681
        %v683 = vpop.f32.mrf.mxu0
        %v684 = vpop.f32.mrf.mxu0
        %v685 = vpop.f32.mrf.mxu0
        %686 = vdwg.mxu0
        %v687 = vadd.f32 %v621, %v682
        %v688 = vrot.slane %v624, 1
        %v693 = vunpack.c.l.b16 %v201
        %v694 = vunpack.c.l.b16 %v202
        %v695 = vunpack.c.l.b16 %v203
        %v696 = vunpack.c.l.b16 %v204
        %v697 = vpack.c.b16 %v694, %v693
        %v698 = vpack.c.b16 %v696, %v695
        %v702 = vsel %vm231, %v688, 0
        %704 = vmatprep.subr.bf16.mxu0 0
        %705 = vmatpush1.bf16.msra.mxu0 0
        %706 = vmatprep.subr.bf16.mxu0 0
        %707 = vmatpush1.bf16.msra.mxu0 0
        %708 = vmatprep.subr.bf16.mxu0 0
        %709 = vmatpush1.bf16.msra.mxu0 0
        %710 = vmatprep.subr.bf16.mxu0 0
        %711 = vmatpush1.bf16.msra.mxu0 0
        %712 = vmatprep.subr.bf16.mxu0 0
        %713 = vmatpush1.bf16.msra.mxu0 0
        %714 = vmatprep.subr.bf16.mxu0 0
        %715 = vmatpush1.bf16.msra.mxu0 0
        %716 = vmatprep.subr.bf16.mxu0 0
        %717 = vmatpush1.bf16.msra.mxu0 %v698
        %718 = vmatprep.subr.bf16.mxu0 0
        %719 = vmatpush1.bf16.msra.mxu0 %v697
        %720 = vmatprep.subr.bf16.mxu0 0
        %721 = vmatpush2.bf16.msra.mxu0 0
        %722 = vmatprep.subr.bf16.mxu0 0
        %723 = vmatpush2.bf16.msra.mxu0 0
        %724 = vmatprep.subr.bf16.mxu0 0
        %725 = vmatpush2.bf16.msra.mxu0 0
        %726 = vmatprep.subr.bf16.mxu0 0
        %727 = vmatpush2.bf16.msra.mxu0 0
        %728 = vmatprep.subr.bf16.mxu0 0
        %729 = vmatpush2.bf16.msra.mxu0 0
        %730 = vmatprep.subr.bf16.mxu0 0
        %731 = vmatpush2.bf16.msra.mxu0 0
        %732 = vmatprep.subr.bf16.mxu0 0
        %733 = vmatpush2.bf16.msra.mxu0 0
        %734 = vmatprep.subr.bf16.mxu0 0
        %735 = vmatpush2.bf16.msra.mxu0 0
        %736 = vmatprep.mubr.bf16.mxu0 0
        %737 = vmatmul.mubr.bf16.gmra.mxu0 %v702
        %v738 = vpop.f32.mrf.mxu0
        %v739 = vadd.f32 0.0, %v738
        %v740 = vpop.f32.mrf.mxu0
        %v741 = vpop.f32.mrf.mxu0
        %v742 = vpop.f32.mrf.mxu0
        %743 = vdwg.mxu0
        %v744 = vadd.f32 %v687, %v739
        %v746 = vlaneseq
        %v747 = vshrl.u32 %v746, 7
        %v748 = vsub.s32 0, %v747
        %v749 = vrot.slane %v205, %v748
        %v751 = vadd.f32 %v744, %v749
        %v752 = vmax.f32 %v751, 0.0
        %vm753 = vcmask 519168
        %v754 = vsel %vm753, %v752, 0.0
        %v755 = vrot.slane %v754, 4
        %v756 = vadd.f32 %v754, %v755
        %v757 = vrot.slane %v756, 2
        %v758 = vadd.f32 %v756, %v757
        %v759 = vrot.slane %v758, 1
        %v760 = vadd.f32 %v758, %v759
        %v761 = vadd.f32 %v760, 0.0
        %s762 = scalar_lea.vmem %s167, 4
        %v763 = vld [vmem:[%s762] sm:$0x7]
        %v764 = vld [vmem:[%s762 + $0x4] sm:$0x7]
        %v765 = vld [vmem:[%s762 + $0x8] sm:$0x7]
        %v767 = vunpack.c.l.b16 %v763
        %v768 = vpack.c.b16 %v767, %v767
        %v770 = vshrl.u32 %v768, 16
        %v772 = vshll.u32 %v768, 16
        %v774 = vrot.slane %v772, 1
        %v775 = vor.u32 %v770, %v774
        %v777 = vsel %vm231, %v775, 0
        %779 = vmatprep.subr.bf16.mxu0 0
        %780 = vmatpush1.bf16.msra.mxu0 0
        %781 = vmatprep.subr.bf16.mxu0 0
        %782 = vmatpush1.bf16.msra.mxu0 0
        %783 = vmatprep.subr.bf16.mxu0 0
        %784 = vmatpush1.bf16.msra.mxu0 0
        %785 = vmatprep.subr.bf16.mxu0 0
        %786 = vmatpush1.bf16.msra.mxu0 0
        %787 = vmatprep.subr.bf16.mxu0 0
        %788 = vmatpush1.bf16.msra.mxu0 0
        %789 = vmatprep.subr.bf16.mxu0 0
        %790 = vmatpush1.bf16.msra.mxu0 0
        %791 = vmatprep.subr.bf16.mxu0 0
        %792 = vmatpush1.bf16.msra.mxu0 %v228
        %793 = vmatprep.subr.bf16.mxu0 0
        %794 = vmatpush1.bf16.msra.mxu0 %v227
        %795 = vmatprep.subr.bf16.mxu0 0
        %796 = vmatpush2.bf16.msra.mxu0 0
        %797 = vmatprep.subr.bf16.mxu0 0
        %798 = vmatpush2.bf16.msra.mxu0 0
        %799 = vmatprep.subr.bf16.mxu0 0
        %800 = vmatpush2.bf16.msra.mxu0 0
        %801 = vmatprep.subr.bf16.mxu0 0
        %802 = vmatpush2.bf16.msra.mxu0 0
        %803 = vmatprep.subr.bf16.mxu0 0
        %804 = vmatpush2.bf16.msra.mxu0 0
        %805 = vmatprep.subr.bf16.mxu0 0
        %806 = vmatpush2.bf16.msra.mxu0 0
        %807 = vmatprep.subr.bf16.mxu0 0
        %808 = vmatpush2.bf16.msra.mxu0 0
        %809 = vmatprep.subr.bf16.mxu0 0
        %810 = vmatpush2.bf16.msra.mxu0 0
        %811 = vmatprep.mubr.bf16.mxu0 0
        %812 = vmatmul.mubr.bf16.gmra.mxu0 %v777
        %v813 = vpop.f32.mrf.mxu0
        %v814 = vadd.f32 0.0, %v813
        %v815 = vpop.f32.mrf.mxu0
        %v816 = vpop.f32.mrf.mxu0
        %v817 = vpop.f32.mrf.mxu0
        %818 = vdwg.mxu0
        %v820 = vsel %vm231, %v763, 0
        %822 = vmatprep.subr.bf16.mxu0 0
        %823 = vmatpush1.bf16.msra.mxu0 0
        %824 = vmatprep.subr.bf16.mxu0 0
        %825 = vmatpush1.bf16.msra.mxu0 0
        %826 = vmatprep.subr.bf16.mxu0 0
        %827 = vmatpush1.bf16.msra.mxu0 0
        %828 = vmatprep.subr.bf16.mxu0 0
        %829 = vmatpush1.bf16.msra.mxu0 0
        %830 = vmatprep.subr.bf16.mxu0 0
        %831 = vmatpush1.bf16.msra.mxu0 0
        %832 = vmatprep.subr.bf16.mxu0 0
        %833 = vmatpush1.bf16.msra.mxu0 0
        %834 = vmatprep.subr.bf16.mxu0 0
        %835 = vmatpush1.bf16.msra.mxu0 %v284
        %836 = vmatprep.subr.bf16.mxu0 0
        %837 = vmatpush1.bf16.msra.mxu0 %v283
        %838 = vmatprep.subr.bf16.mxu0 0
        %839 = vmatpush2.bf16.msra.mxu0 0
        %840 = vmatprep.subr.bf16.mxu0 0
        %841 = vmatpush2.bf16.msra.mxu0 0
        %842 = vmatprep.subr.bf16.mxu0 0
        %843 = vmatpush2.bf16.msra.mxu0 0
        %844 = vmatprep.subr.bf16.mxu0 0
        %845 = vmatpush2.bf16.msra.mxu0 0
        %846 = vmatprep.subr.bf16.mxu0 0
        %847 = vmatpush2.bf16.msra.mxu0 0
        %848 = vmatprep.subr.bf16.mxu0 0
        %849 = vmatpush2.bf16.msra.mxu0 0
        %850 = vmatprep.subr.bf16.mxu0 0
        %851 = vmatpush2.bf16.msra.mxu0 0
        %852 = vmatprep.subr.bf16.mxu0 0
        %853 = vmatpush2.bf16.msra.mxu0 0
        %854 = vmatprep.mubr.bf16.mxu0 0
        %855 = vmatmul.mubr.bf16.gmra.mxu0 %v820
        %v856 = vpop.f32.mrf.mxu0
        %v857 = vadd.f32 %v814, %v856
        %v858 = vpop.f32.mrf.mxu0
        %v859 = vpop.f32.mrf.mxu0
        %v860 = vpop.f32.mrf.mxu0
        %861 = vdwg.mxu0
        %v862 = vrot.slane %v768, 1
        %v864 = vsel %vm231, %v862, 0
        %866 = vmatprep.subr.bf16.mxu0 0
        %867 = vmatpush1.bf16.msra.mxu0 0
        %868 = vmatprep.subr.bf16.mxu0 0
        %869 = vmatpush1.bf16.msra.mxu0 0
        %870 = vmatprep.subr.bf16.mxu0 0
        %871 = vmatpush1.bf16.msra.mxu0 0
        %872 = vmatprep.subr.bf16.mxu0 0
        %873 = vmatpush1.bf16.msra.mxu0 0
        %874 = vmatprep.subr.bf16.mxu0 0
        %875 = vmatpush1.bf16.msra.mxu0 0
        %876 = vmatprep.subr.bf16.mxu0 0
        %877 = vmatpush1.bf16.msra.mxu0 0
        %878 = vmatprep.subr.bf16.mxu0 0
        %879 = vmatpush1.bf16.msra.mxu0 %v340
        %880 = vmatprep.subr.bf16.mxu0 0
        %881 = vmatpush1.bf16.msra.mxu0 %v339
        %882 = vmatprep.subr.bf16.mxu0 0
        %883 = vmatpush2.bf16.msra.mxu0 0
        %884 = vmatprep.subr.bf16.mxu0 0
        %885 = vmatpush2.bf16.msra.mxu0 0
        %886 = vmatprep.subr.bf16.mxu0 0
        %887 = vmatpush2.bf16.msra.mxu0 0
        %888 = vmatprep.subr.bf16.mxu0 0
        %889 = vmatpush2.bf16.msra.mxu0 0
        %890 = vmatprep.subr.bf16.mxu0 0
        %891 = vmatpush2.bf16.msra.mxu0 0
        %892 = vmatprep.subr.bf16.mxu0 0
        %893 = vmatpush2.bf16.msra.mxu0 0
        %894 = vmatprep.subr.bf16.mxu0 0
        %895 = vmatpush2.bf16.msra.mxu0 0
        %896 = vmatprep.subr.bf16.mxu0 0
        %897 = vmatpush2.bf16.msra.mxu0 0
        %898 = vmatprep.mubr.bf16.mxu0 0
        %899 = vmatmul.mubr.bf16.gmra.mxu0 %v864
        %v900 = vpop.f32.mrf.mxu0
        %v901 = vadd.f32 0.0, %v900
        %v902 = vpop.f32.mrf.mxu0
        %v903 = vpop.f32.mrf.mxu0
        %v904 = vpop.f32.mrf.mxu0
        %905 = vdwg.mxu0
        %v906 = vadd.f32 %v857, %v901
        %v908 = vsel %vm231, %v764, 0
        %910 = vmatprep.subr.bf16.mxu0 0
        %911 = vmatpush1.bf16.msra.mxu0 0
        %912 = vmatprep.subr.bf16.mxu0 0
        %913 = vmatpush1.bf16.msra.mxu0 0
        %914 = vmatprep.subr.bf16.mxu0 0
        %915 = vmatpush1.bf16.msra.mxu0 0
        %916 = vmatprep.subr.bf16.mxu0 0
        %917 = vmatpush1.bf16.msra.mxu0 0
        %918 = vmatprep.subr.bf16.mxu0 0
        %919 = vmatpush1.bf16.msra.mxu0 0
        %920 = vmatprep.subr.bf16.mxu0 0
        %921 = vmatpush1.bf16.msra.mxu0 0
        %922 = vmatprep.subr.bf16.mxu0 0
        %923 = vmatpush1.bf16.msra.mxu0 %v396
        %924 = vmatprep.subr.bf16.mxu0 0
        %925 = vmatpush1.bf16.msra.mxu0 %v395
        %926 = vmatprep.subr.bf16.mxu0 0
        %927 = vmatpush2.bf16.msra.mxu0 0
        %928 = vmatprep.subr.bf16.mxu0 0
        %929 = vmatpush2.bf16.msra.mxu0 0
        %930 = vmatprep.subr.bf16.mxu0 0
        %931 = vmatpush2.bf16.msra.mxu0 0
        %932 = vmatprep.subr.bf16.mxu0 0
        %933 = vmatpush2.bf16.msra.mxu0 0
        %934 = vmatprep.subr.bf16.mxu0 0
        %935 = vmatpush2.bf16.msra.mxu0 0
        %936 = vmatprep.subr.bf16.mxu0 0
        %937 = vmatpush2.bf16.msra.mxu0 0
        %938 = vmatprep.subr.bf16.mxu0 0
        %939 = vmatpush2.bf16.msra.mxu0 0
        %940 = vmatprep.subr.bf16.mxu0 0
        %941 = vmatpush2.bf16.msra.mxu0 0
        %942 = vmatprep.mubr.bf16.mxu0 0
        %943 = vmatmul.mubr.bf16.gmra.mxu0 %v908
        %v944 = vpop.f32.mrf.mxu0
        %v945 = vadd.f32 0.0, %v944
        %v946 = vpop.f32.mrf.mxu0
        %v947 = vpop.f32.mrf.mxu0
        %v948 = vpop.f32.mrf.mxu0
        %949 = vdwg.mxu0
        %v950 = vadd.f32 %v906, %v945
        %v952 = vunpack.c.l.b16 %v764
        %v953 = vpack.c.b16 %v952, %v952
        %v955 = vshrl.u32 %v953, 16
        %v957 = vshll.u32 %v953, 16
        %v959 = vrot.slane %v957, 1
        %v960 = vor.u32 %v955, %v959
        %v962 = vsel %vm231, %v960, 0
        %964 = vmatprep.subr.bf16.mxu0 0
        %965 = vmatpush1.bf16.msra.mxu0 0
        %966 = vmatprep.subr.bf16.mxu0 0
        %967 = vmatpush1.bf16.msra.mxu0 0
        %968 = vmatprep.subr.bf16.mxu0 0
        %969 = vmatpush1.bf16.msra.mxu0 0
        %970 = vmatprep.subr.bf16.mxu0 0
        %971 = vmatpush1.bf16.msra.mxu0 0
        %972 = vmatprep.subr.bf16.mxu0 0
        %973 = vmatpush1.bf16.msra.mxu0 0
        %974 = vmatprep.subr.bf16.mxu0 0
        %975 = vmatpush1.bf16.msra.mxu0 0
        %976 = vmatprep.subr.bf16.mxu0 0
        %977 = vmatpush1.bf16.msra.mxu0 %v462
        %978 = vmatprep.subr.bf16.mxu0 0
        %979 = vmatpush1.bf16.msra.mxu0 %v461
        %980 = vmatprep.subr.bf16.mxu0 0
        %981 = vmatpush2.bf16.msra.mxu0 0
        %982 = vmatprep.subr.bf16.mxu0 0
        %983 = vmatpush2.bf16.msra.mxu0 0
        %984 = vmatprep.subr.bf16.mxu0 0
        %985 = vmatpush2.bf16.msra.mxu0 0
        %986 = vmatprep.subr.bf16.mxu0 0
        %987 = vmatpush2.bf16.msra.mxu0 0
        %988 = vmatprep.subr.bf16.mxu0 0
        %989 = vmatpush2.bf16.msra.mxu0 0
        %990 = vmatprep.subr.bf16.mxu0 0
        %991 = vmatpush2.bf16.msra.mxu0 0
        %992 = vmatprep.subr.bf16.mxu0 0
        %993 = vmatpush2.bf16.msra.mxu0 0
        %994 = vmatprep.subr.bf16.mxu0 0
        %995 = vmatpush2.bf16.msra.mxu0 0
        %996 = vmatprep.mubr.bf16.mxu0 0
        %997 = vmatmul.mubr.bf16.gmra.mxu0 %v962
        %v998 = vpop.f32.mrf.mxu0
        %v999 = vadd.f32 0.0, %v998
        %v1000 = vpop.f32.mrf.mxu0
        %v1001 = vpop.f32.mrf.mxu0
        %v1002 = vpop.f32.mrf.mxu0
        %1003 = vdwg.mxu0
        %v1004 = vadd.f32 %v950, %v999
        %v1005 = vrot.slane %v953, 1
        %v1007 = vsel %vm231, %v1005, 0
        %1009 = vmatprep.subr.bf16.mxu0 0
        %1010 = vmatpush1.bf16.msra.mxu0 0
        %1011 = vmatprep.subr.bf16.mxu0 0
        %1012 = vmatpush1.bf16.msra.mxu0 0
        %1013 = vmatprep.subr.bf16.mxu0 0
        %1014 = vmatpush1.bf16.msra.mxu0 0
        %1015 = vmatprep.subr.bf16.mxu0 0
        %1016 = vmatpush1.bf16.msra.mxu0 0
        %1017 = vmatprep.subr.bf16.mxu0 0
        %1018 = vmatpush1.bf16.msra.mxu0 0
        %1019 = vmatprep.subr.bf16.mxu0 0
        %1020 = vmatpush1.bf16.msra.mxu0 0
        %1021 = vmatprep.subr.bf16.mxu0 0
        %1022 = vmatpush1.bf16.msra.mxu0 %v519
        %1023 = vmatprep.subr.bf16.mxu0 0
        %1024 = vmatpush1.bf16.msra.mxu0 %v518
        %1025 = vmatprep.subr.bf16.mxu0 0
        %1026 = vmatpush2.bf16.msra.mxu0 0
        %1027 = vmatprep.subr.bf16.mxu0 0
        %1028 = vmatpush2.bf16.msra.mxu0 0
        %1029 = vmatprep.subr.bf16.mxu0 0
        %1030 = vmatpush2.bf16.msra.mxu0 0
        %1031 = vmatprep.subr.bf16.mxu0 0
        %1032 = vmatpush2.bf16.msra.mxu0 0
        %1033 = vmatprep.subr.bf16.mxu0 0
        %1034 = vmatpush2.bf16.msra.mxu0 0
        %1035 = vmatprep.subr.bf16.mxu0 0
        %1036 = vmatpush2.bf16.msra.mxu0 0
        %1037 = vmatprep.subr.bf16.mxu0 0
        %1038 = vmatpush2.bf16.msra.mxu0 0
        %1039 = vmatprep.subr.bf16.mxu0 0
        %1040 = vmatpush2.bf16.msra.mxu0 0
        %1041 = vmatprep.mubr.bf16.mxu0 0
        %1042 = vmatmul.mubr.bf16.gmra.mxu0 %v1007
        %v1043 = vpop.f32.mrf.mxu0
        %v1044 = vadd.f32 0.0, %v1043
        %v1045 = vpop.f32.mrf.mxu0
        %v1046 = vpop.f32.mrf.mxu0
        %v1047 = vpop.f32.mrf.mxu0
        %1048 = vdwg.mxu0
        %v1049 = vadd.f32 %v1004, %v1044
        %v1051 = vsel %vm231, %v765, 0
        %1053 = vmatprep.subr.bf16.mxu0 0
        %1054 = vmatpush1.bf16.msra.mxu0 0
        %1055 = vmatprep.subr.bf16.mxu0 0
        %1056 = vmatpush1.bf16.msra.mxu0 0
        %1057 = vmatprep.subr.bf16.mxu0 0
        %1058 = vmatpush1.bf16.msra.mxu0 0
        %1059 = vmatprep.subr.bf16.mxu0 0
        %1060 = vmatpush1.bf16.msra.mxu0 0
        %1061 = vmatprep.subr.bf16.mxu0 0
        %1062 = vmatpush1.bf16.msra.mxu0 0
        %1063 = vmatprep.subr.bf16.mxu0 0
        %1064 = vmatpush1.bf16.msra.mxu0 0
        %1065 = vmatprep.subr.bf16.mxu0 0
        %1066 = vmatpush1.bf16.msra.mxu0 %v575
        %1067 = vmatprep.subr.bf16.mxu0 0
        %1068 = vmatpush1.bf16.msra.mxu0 %v574
        %1069 = vmatprep.subr.bf16.mxu0 0
        %1070 = vmatpush2.bf16.msra.mxu0 0
        %1071 = vmatprep.subr.bf16.mxu0 0
        %1072 = vmatpush2.bf16.msra.mxu0 0
        %1073 = vmatprep.subr.bf16.mxu0 0
        %1074 = vmatpush2.bf16.msra.mxu0 0
        %1075 = vmatprep.subr.bf16.mxu0 0
        %1076 = vmatpush2.bf16.msra.mxu0 0
        %1077 = vmatprep.subr.bf16.mxu0 0
        %1078 = vmatpush2.bf16.msra.mxu0 0
        %1079 = vmatprep.subr.bf16.mxu0 0
        %1080 = vmatpush2.bf16.msra.mxu0 0
        %1081 = vmatprep.subr.bf16.mxu0 0
        %1082 = vmatpush2.bf16.msra.mxu0 0
        %1083 = vmatprep.subr.bf16.mxu0 0
        %1084 = vmatpush2.bf16.msra.mxu0 0
        %1085 = vmatprep.mubr.bf16.mxu0 0
        %1086 = vmatmul.mubr.bf16.gmra.mxu0 %v1051
        %v1087 = vpop.f32.mrf.mxu0
        %v1088 = vadd.f32 0.0, %v1087
        %v1089 = vpop.f32.mrf.mxu0
        %v1090 = vpop.f32.mrf.mxu0
        %v1091 = vpop.f32.mrf.mxu0
        %1092 = vdwg.mxu0
        %v1093 = vadd.f32 %v1049, %v1088
        %v1095 = vunpack.c.l.b16 %v765
        %v1096 = vpack.c.b16 %v1095, %v1095
        %v1098 = vshrl.u32 %v1096, 16
        %v1100 = vshll.u32 %v1096, 16
        %v1102 = vrot.slane %v1100, 1
        %v1103 = vor.u32 %v1098, %v1102
        %v1105 = vsel %vm231, %v1103, 0
        %1107 = vmatprep.subr.bf16.mxu0 0
        %1108 = vmatpush1.bf16.msra.mxu0 0
        %1109 = vmatprep.subr.bf16.mxu0 0
        %1110 = vmatpush1.bf16.msra.mxu0 0
        %1111 = vmatprep.subr.bf16.mxu0 0
        %1112 = vmatpush1.bf16.msra.mxu0 0
        %1113 = vmatprep.subr.bf16.mxu0 0
        %1114 = vmatpush1.bf16.msra.mxu0 0
        %1115 = vmatprep.subr.bf16.mxu0 0
        %1116 = vmatpush1.bf16.msra.mxu0 0
        %1117 = vmatprep.subr.bf16.mxu0 0
        %1118 = vmatpush1.bf16.msra.mxu0 0
        %1119 = vmatprep.subr.bf16.mxu0 0
        %1120 = vmatpush1.bf16.msra.mxu0 %v641
        %1121 = vmatprep.subr.bf16.mxu0 0
        %1122 = vmatpush1.bf16.msra.mxu0 %v640
        %1123 = vmatprep.subr.bf16.mxu0 0
        %1124 = vmatpush2.bf16.msra.mxu0 0
        %1125 = vmatprep.subr.bf16.mxu0 0
        %1126 = vmatpush2.bf16.msra.mxu0 0
        %1127 = vmatprep.subr.bf16.mxu0 0
        %1128 = vmatpush2.bf16.msra.mxu0 0
        %1129 = vmatprep.subr.bf16.mxu0 0
        %1130 = vmatpush2.bf16.msra.mxu0 0
        %1131 = vmatprep.subr.bf16.mxu0 0
        %1132 = vmatpush2.bf16.msra.mxu0 0
        %1133 = vmatprep.subr.bf16.mxu0 0
        %1134 = vmatpush2.bf16.msra.mxu0 0
        %1135 = vmatprep.subr.bf16.mxu0 0
        %1136 = vmatpush2.bf16.msra.mxu0 0
        %1137 = vmatprep.subr.bf16.mxu0 0
        %1138 = vmatpush2.bf16.msra.mxu0 0
        %1139 = vmatprep.mubr.bf16.mxu0 0
        %1140 = vmatmul.mubr.bf16.gmra.mxu0 %v1105
        %v1141 = vpop.f32.mrf.mxu0
        %v1142 = vadd.f32 0.0, %v1141
        %v1143 = vpop.f32.mrf.mxu0
        %v1144 = vpop.f32.mrf.mxu0
        %v1145 = vpop.f32.mrf.mxu0
        %1146 = vdwg.mxu0
        %v1147 = vadd.f32 %v1093, %v1142
        %v1148 = vrot.slane %v1096, 1
        %v1150 = vsel %vm231, %v1148, 0
        %1152 = vmatprep.subr.bf16.mxu0 0
        %1153 = vmatpush1.bf16.msra.mxu0 0
        %1154 = vmatprep.subr.bf16.mxu0 0
        %1155 = vmatpush1.bf16.msra.mxu0 0
        %1156 = vmatprep.subr.bf16.mxu0 0
        %1157 = vmatpush1.bf16.msra.mxu0 0
        %1158 = vmatprep.subr.bf16.mxu0 0
        %1159 = vmatpush1.bf16.msra.mxu0 0
        %1160 = vmatprep.subr.bf16.mxu0 0
        %1161 = vmatpush1.bf16.msra.mxu0 0
        %1162 = vmatprep.subr.bf16.mxu0 0
        %1163 = vmatpush1.bf16.msra.mxu0 0
        %1164 = vmatprep.subr.bf16.mxu0 0
        %1165 = vmatpush1.bf16.msra.mxu0 %v698
        %1166 = vmatprep.subr.bf16.mxu0 0
        %1167 = vmatpush1.bf16.msra.mxu0 %v697
        %1168 = vmatprep.subr.bf16.mxu0 0
        %1169 = vmatpush2.bf16.msra.mxu0 0
        %1170 = vmatprep.subr.bf16.mxu0 0
        %1171 = vmatpush2.bf16.msra.mxu0 0
        %1172 = vmatprep.subr.bf16.mxu0 0
        %1173 = vmatpush2.bf16.msra.mxu0 0
        %1174 = vmatprep.subr.bf16.mxu0 0
        %1175 = vmatpush2.bf16.msra.mxu0 0
        %1176 = vmatprep.subr.bf16.mxu0 0
        %1177 = vmatpush2.bf16.msra.mxu0 0
        %1178 = vmatprep.subr.bf16.mxu0 0
        %1179 = vmatpush2.bf16.msra.mxu0 0
        %1180 = vmatprep.subr.bf16.mxu0 0
        %1181 = vmatpush2.bf16.msra.mxu0 0
        %1182 = vmatprep.subr.bf16.mxu0 0
        %1183 = vmatpush2.bf16.msra.mxu0 0
        %1184 = vmatprep.mubr.bf16.mxu0 0
        %1185 = vmatmul.mubr.bf16.gmra.mxu0 %v1150
        %v1186 = vpop.f32.mrf.mxu0
        %v1187 = vadd.f32 0.0, %v1186
        %v1188 = vpop.f32.mrf.mxu0
        %v1189 = vpop.f32.mrf.mxu0
        %v1190 = vpop.f32.mrf.mxu0
        %1191 = vdwg.mxu0
        %v1192 = vadd.f32 %v1147, %v1187
        %v1193 = vadd.f32 %v1192, %v749
        %v1194 = vmax.f32 %v1193, 0.0
        %v1195 = vsel %vm753, %v1194, 0.0
        %v1196 = vrot.slane %v1195, 4
        %v1197 = vadd.f32 %v1195, %v1196
        %v1198 = vrot.slane %v1197, 2
        %v1199 = vadd.f32 %v1197, %v1198
        %v1200 = vrot.slane %v1199, 1
        %v1201 = vadd.f32 %v1199, %v1200
        %v1202 = vadd.f32 %v761, %v1201
        %s1203 = scalar_lea.vmem %s167, 8
        %v1204 = vld [vmem:[%s1203] sm:$0x7]
        %v1205 = vld [vmem:[%s1203 + $0x4] sm:$0x7]
        %v1206 = vld [vmem:[%s1203 + $0x8] sm:$0x7]
        %v1208 = vunpack.c.l.b16 %v1204
        %v1209 = vpack.c.b16 %v1208, %v1208
        %v1211 = vshrl.u32 %v1209, 16
        %v1213 = vshll.u32 %v1209, 16
        %v1215 = vrot.slane %v1213, 1
        %v1216 = vor.u32 %v1211, %v1215
        %v1218 = vsel %vm231, %v1216, 0
        %1220 = vmatprep.subr.bf16.mxu0 0
        %1221 = vmatpush1.bf16.msra.mxu0 0
        %1222 = vmatprep.subr.bf16.mxu0 0
        %1223 = vmatpush1.bf16.msra.mxu0 0
        %1224 = vmatprep.subr.bf16.mxu0 0
        %1225 = vmatpush1.bf16.msra.mxu0 0
        %1226 = vmatprep.subr.bf16.mxu0 0
        %1227 = vmatpush1.bf16.msra.mxu0 0
        %1228 = vmatprep.subr.bf16.mxu0 0
        %1229 = vmatpush1.bf16.msra.mxu0 0
        %1230 = vmatprep.subr.bf16.mxu0 0
        %1231 = vmatpush1.bf16.msra.mxu0 0
        %1232 = vmatprep.subr.bf16.mxu0 0
        %1233 = vmatpush1.bf16.msra.mxu0 %v228
        %1234 = vmatprep.subr.bf16.mxu0 0
        %1235 = vmatpush1.bf16.msra.mxu0 %v227
        %1236 = vmatprep.subr.bf16.mxu0 0
        %1237 = vmatpush2.bf16.msra.mxu0 0
        %1238 = vmatprep.subr.bf16.mxu0 0
        %1239 = vmatpush2.bf16.msra.mxu0 0
        %1240 = vmatprep.subr.bf16.mxu0 0
        %1241 = vmatpush2.bf16.msra.mxu0 0
        %1242 = vmatprep.subr.bf16.mxu0 0
        %1243 = vmatpush2.bf16.msra.mxu0 0
        %1244 = vmatprep.subr.bf16.mxu0 0
        %1245 = vmatpush2.bf16.msra.mxu0 0
        %1246 = vmatprep.subr.bf16.mxu0 0
        %1247 = vmatpush2.bf16.msra.mxu0 0
        %1248 = vmatprep.subr.bf16.mxu0 0
        %1249 = vmatpush2.bf16.msra.mxu0 0
        %1250 = vmatprep.subr.bf16.mxu0 0
        %1251 = vmatpush2.bf16.msra.mxu0 0
        %1252 = vmatprep.mubr.bf16.mxu0 0
        %1253 = vmatmul.mubr.bf16.gmra.mxu0 %v1218
        %v1254 = vpop.f32.mrf.mxu0
        %v1255 = vadd.f32 0.0, %v1254
        %v1256 = vpop.f32.mrf.mxu0
        %v1257 = vpop.f32.mrf.mxu0
        %v1258 = vpop.f32.mrf.mxu0
        %1259 = vdwg.mxu0
        %v1261 = vsel %vm231, %v1204, 0
        %1263 = vmatprep.subr.bf16.mxu0 0
        %1264 = vmatpush1.bf16.msra.mxu0 0
        %1265 = vmatprep.subr.bf16.mxu0 0
        %1266 = vmatpush1.bf16.msra.mxu0 0
        %1267 = vmatprep.subr.bf16.mxu0 0
        %1268 = vmatpush1.bf16.msra.mxu0 0
        %1269 = vmatprep.subr.bf16.mxu0 0
        %1270 = vmatpush1.bf16.msra.mxu0 0
        %1271 = vmatprep.subr.bf16.mxu0 0
        %1272 = vmatpush1.bf16.msra.mxu0 0
        %1273 = vmatprep.subr.bf16.mxu0 0
        %1274 = vmatpush1.bf16.msra.mxu0 0
        %1275 = vmatprep.subr.bf16.mxu0 0
        %1276 = vmatpush1.bf16.msra.mxu0 %v284
        %1277 = vmatprep.subr.bf16.mxu0 0
        %1278 = vmatpush1.bf16.msra.mxu0 %v283
        %1279 = vmatprep.subr.bf16.mxu0 0
        %1280 = vmatpush2.bf16.msra.mxu0 0
        %1281 = vmatprep.subr.bf16.mxu0 0
        %1282 = vmatpush2.bf16.msra.mxu0 0
        %1283 = vmatprep.subr.bf16.mxu0 0
        %1284 = vmatpush2.bf16.msra.mxu0 0
        %1285 = vmatprep.subr.bf16.mxu0 0
        %1286 = vmatpush2.bf16.msra.mxu0 0
        %1287 = vmatprep.subr.bf16.mxu0 0
        %1288 = vmatpush2.bf16.msra.mxu0 0
        %1289 = vmatprep.subr.bf16.mxu0 0
        %1290 = vmatpush2.bf16.msra.mxu0 0
        %1291 = vmatprep.subr.bf16.mxu0 0
        %1292 = vmatpush2.bf16.msra.mxu0 0
        %1293 = vmatprep.subr.bf16.mxu0 0
        %1294 = vmatpush2.bf16.msra.mxu0 0
        %1295 = vmatprep.mubr.bf16.mxu0 0
        %1296 = vmatmul.mubr.bf16.gmra.mxu0 %v1261
        %v1297 = vpop.f32.mrf.mxu0
        %v1298 = vadd.f32 %v1255, %v1297
        %v1299 = vpop.f32.mrf.mxu0
        %v1300 = vpop.f32.mrf.mxu0
        %v1301 = vpop.f32.mrf.mxu0
        %1302 = vdwg.mxu0
        %v1303 = vrot.slane %v1209, 1
        %v1305 = vsel %vm231, %v1303, 0
        %1307 = vmatprep.subr.bf16.mxu0 0
        %1308 = vmatpush1.bf16.msra.mxu0 0
        %1309 = vmatprep.subr.bf16.mxu0 0
        %1310 = vmatpush1.bf16.msra.mxu0 0
        %1311 = vmatprep.subr.bf16.mxu0 0
        %1312 = vmatpush1.bf16.msra.mxu0 0
        %1313 = vmatprep.subr.bf16.mxu0 0
        %1314 = vmatpush1.bf16.msra.mxu0 0
        %1315 = vmatprep.subr.bf16.mxu0 0
        %1316 = vmatpush1.bf16.msra.mxu0 0
        %1317 = vmatprep.subr.bf16.mxu0 0
        %1318 = vmatpush1.bf16.msra.mxu0 0
        %1319 = vmatprep.subr.bf16.mxu0 0
        %1320 = vmatpush1.bf16.msra.mxu0 %v340
        %1321 = vmatprep.subr.bf16.mxu0 0
        %1322 = vmatpush1.bf16.msra.mxu0 %v339
        %1323 = vmatprep.subr.bf16.mxu0 0
        %1324 = vmatpush2.bf16.msra.mxu0 0
        %1325 = vmatprep.subr.bf16.mxu0 0
        %1326 = vmatpush2.bf16.msra.mxu0 0
        %1327 = vmatprep.subr.bf16.mxu0 0
        %1328 = vmatpush2.bf16.msra.mxu0 0
        %1329 = vmatprep.subr.bf16.mxu0 0
        %1330 = vmatpush2.bf16.msra.mxu0 0
        %1331 = vmatprep.subr.bf16.mxu0 0
        %1332 = vmatpush2.bf16.msra.mxu0 0
        %1333 = vmatprep.subr.bf16.mxu0 0
        %1334 = vmatpush2.bf16.msra.mxu0 0
        %1335 = vmatprep.subr.bf16.mxu0 0
        %1336 = vmatpush2.bf16.msra.mxu0 0
        %1337 = vmatprep.subr.bf16.mxu0 0
        %1338 = vmatpush2.bf16.msra.mxu0 0
        %1339 = vmatprep.mubr.bf16.mxu0 0
        %1340 = vmatmul.mubr.bf16.gmra.mxu0 %v1305
        %v1341 = vpop.f32.mrf.mxu0
        %v1342 = vadd.f32 0.0, %v1341
        %v1343 = vpop.f32.mrf.mxu0
        %v1344 = vpop.f32.mrf.mxu0
        %v1345 = vpop.f32.mrf.mxu0
        %1346 = vdwg.mxu0
        %v1347 = vadd.f32 %v1298, %v1342
        %v1349 = vsel %vm231, %v1205, 0
        %1351 = vmatprep.subr.bf16.mxu0 0
        %1352 = vmatpush1.bf16.msra.mxu0 0
        %1353 = vmatprep.subr.bf16.mxu0 0
        %1354 = vmatpush1.bf16.msra.mxu0 0
        %1355 = vmatprep.subr.bf16.mxu0 0
        %1356 = vmatpush1.bf16.msra.mxu0 0
        %1357 = vmatprep.subr.bf16.mxu0 0
        %1358 = vmatpush1.bf16.msra.mxu0 0
        %1359 = vmatprep.subr.bf16.mxu0 0
        %1360 = vmatpush1.bf16.msra.mxu0 0
        %1361 = vmatprep.subr.bf16.mxu0 0
        %1362 = vmatpush1.bf16.msra.mxu0 0
        %1363 = vmatprep.subr.bf16.mxu0 0
        %1364 = vmatpush1.bf16.msra.mxu0 %v396
        %1365 = vmatprep.subr.bf16.mxu0 0
        %1366 = vmatpush1.bf16.msra.mxu0 %v395
        %1367 = vmatprep.subr.bf16.mxu0 0
        %1368 = vmatpush2.bf16.msra.mxu0 0
        %1369 = vmatprep.subr.bf16.mxu0 0
        %1370 = vmatpush2.bf16.msra.mxu0 0
        %1371 = vmatprep.subr.bf16.mxu0 0
        %1372 = vmatpush2.bf16.msra.mxu0 0
        %1373 = vmatprep.subr.bf16.mxu0 0
        %1374 = vmatpush2.bf16.msra.mxu0 0
        %1375 = vmatprep.subr.bf16.mxu0 0
        %1376 = vmatpush2.bf16.msra.mxu0 0
        %1377 = vmatprep.subr.bf16.mxu0 0
        %1378 = vmatpush2.bf16.msra.mxu0 0
        %1379 = vmatprep.subr.bf16.mxu0 0
        %1380 = vmatpush2.bf16.msra.mxu0 0
        %1381 = vmatprep.subr.bf16.mxu0 0
        %1382 = vmatpush2.bf16.msra.mxu0 0
        %1383 = vmatprep.mubr.bf16.mxu0 0
        %1384 = vmatmul.mubr.bf16.gmra.mxu0 %v1349
        %v1385 = vpop.f32.mrf.mxu0
        %v1386 = vadd.f32 0.0, %v1385
        %v1387 = vpop.f32.mrf.mxu0
        %v1388 = vpop.f32.mrf.mxu0
        %v1389 = vpop.f32.mrf.mxu0
        %1390 = vdwg.mxu0
        %v1391 = vadd.f32 %v1347, %v1386
        %v1393 = vunpack.c.l.b16 %v1205
        %v1394 = vpack.c.b16 %v1393, %v1393
        %v1396 = vshrl.u32 %v1394, 16
        %v1398 = vshll.u32 %v1394, 16
        %v1400 = vrot.slane %v1398, 1
        %v1401 = vor.u32 %v1396, %v1400
        %v1403 = vsel %vm231, %v1401, 0
        %1405 = vmatprep.subr.bf16.mxu0 0
        %1406 = vmatpush1.bf16.msra.mxu0 0
        %1407 = vmatprep.subr.bf16.mxu0 0
        %1408 = vmatpush1.bf16.msra.mxu0 0
        %1409 = vmatprep.subr.bf16.mxu0 0
        %1410 = vmatpush1.bf16.msra.mxu0 0
        %1411 = vmatprep.subr.bf16.mxu0 0
        %1412 = vmatpush1.bf16.msra.mxu0 0
        %1413 = vmatprep.subr.bf16.mxu0 0
        %1414 = vmatpush1.bf16.msra.mxu0 0
        %1415 = vmatprep.subr.bf16.mxu0 0
        %1416 = vmatpush1.bf16.msra.mxu0 0
        %1417 = vmatprep.subr.bf16.mxu0 0
        %1418 = vmatpush1.bf16.msra.mxu0 %v462
        %1419 = vmatprep.subr.bf16.mxu0 0
        %1420 = vmatpush1.bf16.msra.mxu0 %v461
        %1421 = vmatprep.subr.bf16.mxu0 0
        %1422 = vmatpush2.bf16.msra.mxu0 0
        %1423 = vmatprep.subr.bf16.mxu0 0
        %1424 = vmatpush2.bf16.msra.mxu0 0
        %1425 = vmatprep.subr.bf16.mxu0 0
        %1426 = vmatpush2.bf16.msra.mxu0 0
        %1427 = vmatprep.subr.bf16.mxu0 0
        %1428 = vmatpush2.bf16.msra.mxu0 0
        %1429 = vmatprep.subr.bf16.mxu0 0
        %1430 = vmatpush2.bf16.msra.mxu0 0
        %1431 = vmatprep.subr.bf16.mxu0 0
        %1432 = vmatpush2.bf16.msra.mxu0 0
        %1433 = vmatprep.subr.bf16.mxu0 0
        %1434 = vmatpush2.bf16.msra.mxu0 0
        %1435 = vmatprep.subr.bf16.mxu0 0
        %1436 = vmatpush2.bf16.msra.mxu0 0
        %1437 = vmatprep.mubr.bf16.mxu0 0
        %1438 = vmatmul.mubr.bf16.gmra.mxu0 %v1403
        %v1439 = vpop.f32.mrf.mxu0
        %v1440 = vadd.f32 0.0, %v1439
        %v1441 = vpop.f32.mrf.mxu0
        %v1442 = vpop.f32.mrf.mxu0
        %v1443 = vpop.f32.mrf.mxu0
        %1444 = vdwg.mxu0
        %v1445 = vadd.f32 %v1391, %v1440
        %v1446 = vrot.slane %v1394, 1
        %v1448 = vsel %vm231, %v1446, 0
        %1450 = vmatprep.subr.bf16.mxu0 0
        %1451 = vmatpush1.bf16.msra.mxu0 0
        %1452 = vmatprep.subr.bf16.mxu0 0
        %1453 = vmatpush1.bf16.msra.mxu0 0
        %1454 = vmatprep.subr.bf16.mxu0 0
        %1455 = vmatpush1.bf16.msra.mxu0 0
        %1456 = vmatprep.subr.bf16.mxu0 0
        %1457 = vmatpush1.bf16.msra.mxu0 0
        %1458 = vmatprep.subr.bf16.mxu0 0
        %1459 = vmatpush1.bf16.msra.mxu0 0
        %1460 = vmatprep.subr.bf16.mxu0 0
        %1461 = vmatpush1.bf16.msra.mxu0 0
        %1462 = vmatprep.subr.bf16.mxu0 0
        %1463 = vmatpush1.bf16.msra.mxu0 %v519
        %1464 = vmatprep.subr.bf16.mxu0 0
        %1465 = vmatpush1.bf16.msra.mxu0 %v518
        %1466 = vmatprep.subr.bf16.mxu0 0
        %1467 = vmatpush2.bf16.msra.mxu0 0
        %1468 = vmatprep.subr.bf16.mxu0 0
        %1469 = vmatpush2.bf16.msra.mxu0 0
        %1470 = vmatprep.subr.bf16.mxu0 0
        %1471 = vmatpush2.bf16.msra.mxu0 0
        %1472 = vmatprep.subr.bf16.mxu0 0
        %1473 = vmatpush2.bf16.msra.mxu0 0
        %1474 = vmatprep.subr.bf16.mxu0 0
        %1475 = vmatpush2.bf16.msra.mxu0 0
        %1476 = vmatprep.subr.bf16.mxu0 0
        %1477 = vmatpush2.bf16.msra.mxu0 0
        %1478 = vmatprep.subr.bf16.mxu0 0
        %1479 = vmatpush2.bf16.msra.mxu0 0
        %1480 = vmatprep.subr.bf16.mxu0 0
        %1481 = vmatpush2.bf16.msra.mxu0 0
        %1482 = vmatprep.mubr.bf16.mxu0 0
        %1483 = vmatmul.mubr.bf16.gmra.mxu0 %v1448
        %v1484 = vpop.f32.mrf.mxu0
        %v1485 = vadd.f32 0.0, %v1484
        %v1486 = vpop.f32.mrf.mxu0
        %v1487 = vpop.f32.mrf.mxu0
        %v1488 = vpop.f32.mrf.mxu0
        %1489 = vdwg.mxu0
        %v1490 = vadd.f32 %v1445, %v1485
        %v1492 = vsel %vm231, %v1206, 0
        %1494 = vmatprep.subr.bf16.mxu0 0
        %1495 = vmatpush1.bf16.msra.mxu0 0
        %1496 = vmatprep.subr.bf16.mxu0 0
        %1497 = vmatpush1.bf16.msra.mxu0 0
        %1498 = vmatprep.subr.bf16.mxu0 0
        %1499 = vmatpush1.bf16.msra.mxu0 0
        %1500 = vmatprep.subr.bf16.mxu0 0
        %1501 = vmatpush1.bf16.msra.mxu0 0
        %1502 = vmatprep.subr.bf16.mxu0 0
        %1503 = vmatpush1.bf16.msra.mxu0 0
        %1504 = vmatprep.subr.bf16.mxu0 0
        %1505 = vmatpush1.bf16.msra.mxu0 0
        %1506 = vmatprep.subr.bf16.mxu0 0
        %1507 = vmatpush1.bf16.msra.mxu0 %v575
        %1508 = vmatprep.subr.bf16.mxu0 0
        %1509 = vmatpush1.bf16.msra.mxu0 %v574
        %1510 = vmatprep.subr.bf16.mxu0 0
        %1511 = vmatpush2.bf16.msra.mxu0 0
        %1512 = vmatprep.subr.bf16.mxu0 0
        %1513 = vmatpush2.bf16.msra.mxu0 0
        %1514 = vmatprep.subr.bf16.mxu0 0
        %1515 = vmatpush2.bf16.msra.mxu0 0
        %1516 = vmatprep.subr.bf16.mxu0 0
        %1517 = vmatpush2.bf16.msra.mxu0 0
        %1518 = vmatprep.subr.bf16.mxu0 0
        %1519 = vmatpush2.bf16.msra.mxu0 0
        %1520 = vmatprep.subr.bf16.mxu0 0
        %1521 = vmatpush2.bf16.msra.mxu0 0
        %1522 = vmatprep.subr.bf16.mxu0 0
        %1523 = vmatpush2.bf16.msra.mxu0 0
        %1524 = vmatprep.subr.bf16.mxu0 0
        %1525 = vmatpush2.bf16.msra.mxu0 0
        %1526 = vmatprep.mubr.bf16.mxu0 0
        %1527 = vmatmul.mubr.bf16.gmra.mxu0 %v1492
        %v1528 = vpop.f32.mrf.mxu0
        %v1529 = vadd.f32 0.0, %v1528
        %v1530 = vpop.f32.mrf.mxu0
        %v1531 = vpop.f32.mrf.mxu0
        %v1532 = vpop.f32.mrf.mxu0
        %1533 = vdwg.mxu0
        %v1534 = vadd.f32 %v1490, %v1529
        %v1536 = vunpack.c.l.b16 %v1206
        %v1537 = vpack.c.b16 %v1536, %v1536
        %v1539 = vshrl.u32 %v1537, 16
        %v1541 = vshll.u32 %v1537, 16
        %v1543 = vrot.slane %v1541, 1
        %v1544 = vor.u32 %v1539, %v1543
        %v1546 = vsel %vm231, %v1544, 0
        %1548 = vmatprep.subr.bf16.mxu0 0
        %1549 = vmatpush1.bf16.msra.mxu0 0
        %1550 = vmatprep.subr.bf16.mxu0 0
        %1551 = vmatpush1.bf16.msra.mxu0 0
        %1552 = vmatprep.subr.bf16.mxu0 0
        %1553 = vmatpush1.bf16.msra.mxu0 0
        %1554 = vmatprep.subr.bf16.mxu0 0
        %1555 = vmatpush1.bf16.msra.mxu0 0
        %1556 = vmatprep.subr.bf16.mxu0 0
        %1557 = vmatpush1.bf16.msra.mxu0 0
        %1558 = vmatprep.subr.bf16.mxu0 0
        %1559 = vmatpush1.bf16.msra.mxu0 0
        %1560 = vmatprep.subr.bf16.mxu0 0
        %1561 = vmatpush1.bf16.msra.mxu0 %v641
        %1562 = vmatprep.subr.bf16.mxu0 0
        %1563 = vmatpush1.bf16.msra.mxu0 %v640
        %1564 = vmatprep.subr.bf16.mxu0 0
        %1565 = vmatpush2.bf16.msra.mxu0 0
        %1566 = vmatprep.subr.bf16.mxu0 0
        %1567 = vmatpush2.bf16.msra.mxu0 0
        %1568 = vmatprep.subr.bf16.mxu0 0
        %1569 = vmatpush2.bf16.msra.mxu0 0
        %1570 = vmatprep.subr.bf16.mxu0 0
        %1571 = vmatpush2.bf16.msra.mxu0 0
        %1572 = vmatprep.subr.bf16.mxu0 0
        %1573 = vmatpush2.bf16.msra.mxu0 0
        %1574 = vmatprep.subr.bf16.mxu0 0
        %1575 = vmatpush2.bf16.msra.mxu0 0
        %1576 = vmatprep.subr.bf16.mxu0 0
        %1577 = vmatpush2.bf16.msra.mxu0 0
        %1578 = vmatprep.subr.bf16.mxu0 0
        %1579 = vmatpush2.bf16.msra.mxu0 0
        %1580 = vmatprep.mubr.bf16.mxu0 0
        %1581 = vmatmul.mubr.bf16.gmra.mxu0 %v1546
        %v1582 = vpop.f32.mrf.mxu0
        %v1583 = vadd.f32 0.0, %v1582
        %v1584 = vpop.f32.mrf.mxu0
        %v1585 = vpop.f32.mrf.mxu0
        %v1586 = vpop.f32.mrf.mxu0
        %1587 = vdwg.mxu0
        %v1588 = vadd.f32 %v1534, %v1583
        %v1589 = vrot.slane %v1537, 1
        %v1591 = vsel %vm231, %v1589, 0
        %1593 = vmatprep.subr.bf16.mxu0 0
        %1594 = vmatpush1.bf16.msra.mxu0 0
        %1595 = vmatprep.subr.bf16.mxu0 0
        %1596 = vmatpush1.bf16.msra.mxu0 0
        %1597 = vmatprep.subr.bf16.mxu0 0
        %1598 = vmatpush1.bf16.msra.mxu0 0
        %1599 = vmatprep.subr.bf16.mxu0 0
        %1600 = vmatpush1.bf16.msra.mxu0 0
        %1601 = vmatprep.subr.bf16.mxu0 0
        %1602 = vmatpush1.bf16.msra.mxu0 0
        %1603 = vmatprep.subr.bf16.mxu0 0
        %1604 = vmatpush1.bf16.msra.mxu0 0
        %1605 = vmatprep.subr.bf16.mxu0 0
        %1606 = vmatpush1.bf16.msra.mxu0 %v698
        %1607 = vmatprep.subr.bf16.mxu0 0
        %1608 = vmatpush1.bf16.msra.mxu0 %v697
        %1609 = vmatprep.subr.bf16.mxu0 0
        %1610 = vmatpush2.bf16.msra.mxu0 0
        %1611 = vmatprep.subr.bf16.mxu0 0
        %1612 = vmatpush2.bf16.msra.mxu0 0
        %1613 = vmatprep.subr.bf16.mxu0 0
        %1614 = vmatpush2.bf16.msra.mxu0 0
        %1615 = vmatprep.subr.bf16.mxu0 0
        %1616 = vmatpush2.bf16.msra.mxu0 0
        %1617 = vmatprep.subr.bf16.mxu0 0
        %1618 = vmatpush2.bf16.msra.mxu0 0
        %1619 = vmatprep.subr.bf16.mxu0 0
        %1620 = vmatpush2.bf16.msra.mxu0 0
        %1621 = vmatprep.subr.bf16.mxu0 0
        %1622 = vmatpush2.bf16.msra.mxu0 0
        %1623 = vmatprep.subr.bf16.mxu0 0
        %1624 = vmatpush2.bf16.msra.mxu0 0
        %1625 = vmatprep.mubr.bf16.mxu0 0
        %1626 = vmatmul.mubr.bf16.gmra.mxu0 %v1591
        %v1627 = vpop.f32.mrf.mxu0
        %v1628 = vadd.f32 0.0, %v1627
        %v1629 = vpop.f32.mrf.mxu0
        %v1630 = vpop.f32.mrf.mxu0
        %v1631 = vpop.f32.mrf.mxu0
        %1632 = vdwg.mxu0
        %v1633 = vadd.f32 %v1588, %v1628
        %v1634 = vadd.f32 %v1633, %v749
        %v1635 = vmax.f32 %v1634, 0.0
        %v1636 = vsel %vm753, %v1635, 0.0
        %v1637 = vrot.slane %v1636, 4
        %v1638 = vadd.f32 %v1636, %v1637
        %v1639 = vrot.slane %v1638, 2
        %v1640 = vadd.f32 %v1638, %v1639
        %v1641 = vrot.slane %v1640, 1
        %v1642 = vadd.f32 %v1640, %v1641
        %v1643 = vadd.f32 %v1202, %v1642
        %s1644 = scalar_lea.vmem %s167, 12
        %v1645 = vld [vmem:[%s1644] sm:$0x7]
        %v1646 = vld [vmem:[%s1644 + $0x4] sm:$0x7]
        %v1647 = vld [vmem:[%s1644 + $0x8] sm:$0x7]
        %v1649 = vunpack.c.l.b16 %v1645
        %v1650 = vpack.c.b16 %v1649, %v1649
        %v1652 = vshrl.u32 %v1650, 16
        %v1654 = vshll.u32 %v1650, 16
        %v1656 = vrot.slane %v1654, 1
        %v1657 = vor.u32 %v1652, %v1656
        %v1659 = vsel %vm231, %v1657, 0
        %1661 = vmatprep.subr.bf16.mxu0 0
        %1662 = vmatpush1.bf16.msra.mxu0 0
        %1663 = vmatprep.subr.bf16.mxu0 0
        %1664 = vmatpush1.bf16.msra.mxu0 0
        %1665 = vmatprep.subr.bf16.mxu0 0
        %1666 = vmatpush1.bf16.msra.mxu0 0
        %1667 = vmatprep.subr.bf16.mxu0 0
        %1668 = vmatpush1.bf16.msra.mxu0 0
        %1669 = vmatprep.subr.bf16.mxu0 0
        %1670 = vmatpush1.bf16.msra.mxu0 0
        %1671 = vmatprep.subr.bf16.mxu0 0
        %1672 = vmatpush1.bf16.msra.mxu0 0
        %1673 = vmatprep.subr.bf16.mxu0 0
        %1674 = vmatpush1.bf16.msra.mxu0 %v228
        %1675 = vmatprep.subr.bf16.mxu0 0
        %1676 = vmatpush1.bf16.msra.mxu0 %v227
        %1677 = vmatprep.subr.bf16.mxu0 0
        %1678 = vmatpush2.bf16.msra.mxu0 0
        %1679 = vmatprep.subr.bf16.mxu0 0
        %1680 = vmatpush2.bf16.msra.mxu0 0
        %1681 = vmatprep.subr.bf16.mxu0 0
        %1682 = vmatpush2.bf16.msra.mxu0 0
        %1683 = vmatprep.subr.bf16.mxu0 0
        %1684 = vmatpush2.bf16.msra.mxu0 0
        %1685 = vmatprep.subr.bf16.mxu0 0
        %1686 = vmatpush2.bf16.msra.mxu0 0
        %1687 = vmatprep.subr.bf16.mxu0 0
        %1688 = vmatpush2.bf16.msra.mxu0 0
        %1689 = vmatprep.subr.bf16.mxu0 0
        %1690 = vmatpush2.bf16.msra.mxu0 0
        %1691 = vmatprep.subr.bf16.mxu0 0
        %1692 = vmatpush2.bf16.msra.mxu0 0
        %1693 = vmatprep.mubr.bf16.mxu0 0
        %1694 = vmatmul.mubr.bf16.gmra.mxu0 %v1659
        %v1695 = vpop.f32.mrf.mxu0
        %v1696 = vadd.f32 0.0, %v1695
        %v1697 = vpop.f32.mrf.mxu0
        %v1698 = vpop.f32.mrf.mxu0
        %v1699 = vpop.f32.mrf.mxu0
        %1700 = vdwg.mxu0
        %v1702 = vsel %vm231, %v1645, 0
        %1704 = vmatprep.subr.bf16.mxu0 0
        %1705 = vmatpush1.bf16.msra.mxu0 0
        %1706 = vmatprep.subr.bf16.mxu0 0
        %1707 = vmatpush1.bf16.msra.mxu0 0
        %1708 = vmatprep.subr.bf16.mxu0 0
        %1709 = vmatpush1.bf16.msra.mxu0 0
        %1710 = vmatprep.subr.bf16.mxu0 0
        %1711 = vmatpush1.bf16.msra.mxu0 0
        %1712 = vmatprep.subr.bf16.mxu0 0
        %1713 = vmatpush1.bf16.msra.mxu0 0
        %1714 = vmatprep.subr.bf16.mxu0 0
        %1715 = vmatpush1.bf16.msra.mxu0 0
        %1716 = vmatprep.subr.bf16.mxu0 0
        %1717 = vmatpush1.bf16.msra.mxu0 %v284
        %1718 = vmatprep.subr.bf16.mxu0 0
        %1719 = vmatpush1.bf16.msra.mxu0 %v283
        %1720 = vmatprep.subr.bf16.mxu0 0
        %1721 = vmatpush2.bf16.msra.mxu0 0
        %1722 = vmatprep.subr.bf16.mxu0 0
        %1723 = vmatpush2.bf16.msra.mxu0 0
        %1724 = vmatprep.subr.bf16.mxu0 0
        %1725 = vmatpush2.bf16.msra.mxu0 0
        %1726 = vmatprep.subr.bf16.mxu0 0
        %1727 = vmatpush2.bf16.msra.mxu0 0
        %1728 = vmatprep.subr.bf16.mxu0 0
        %1729 = vmatpush2.bf16.msra.mxu0 0
        %1730 = vmatprep.subr.bf16.mxu0 0
        %1731 = vmatpush2.bf16.msra.mxu0 0
        %1732 = vmatprep.subr.bf16.mxu0 0
        %1733 = vmatpush2.bf16.msra.mxu0 0
        %1734 = vmatprep.subr.bf16.mxu0 0
        %1735 = vmatpush2.bf16.msra.mxu0 0
        %1736 = vmatprep.mubr.bf16.mxu0 0
        %1737 = vmatmul.mubr.bf16.gmra.mxu0 %v1702
        %v1738 = vpop.f32.mrf.mxu0
        %v1739 = vadd.f32 %v1696, %v1738
        %v1740 = vpop.f32.mrf.mxu0
        %v1741 = vpop.f32.mrf.mxu0
        %v1742 = vpop.f32.mrf.mxu0
        %1743 = vdwg.mxu0
        %v1744 = vrot.slane %v1650, 1
        %v1746 = vsel %vm231, %v1744, 0
        %1748 = vmatprep.subr.bf16.mxu0 0
        %1749 = vmatpush1.bf16.msra.mxu0 0
        %1750 = vmatprep.subr.bf16.mxu0 0
        %1751 = vmatpush1.bf16.msra.mxu0 0
        %1752 = vmatprep.subr.bf16.mxu0 0
        %1753 = vmatpush1.bf16.msra.mxu0 0
        %1754 = vmatprep.subr.bf16.mxu0 0
        %1755 = vmatpush1.bf16.msra.mxu0 0
        %1756 = vmatprep.subr.bf16.mxu0 0
        %1757 = vmatpush1.bf16.msra.mxu0 0
        %1758 = vmatprep.subr.bf16.mxu0 0
        %1759 = vmatpush1.bf16.msra.mxu0 0
        %1760 = vmatprep.subr.bf16.mxu0 0
        %1761 = vmatpush1.bf16.msra.mxu0 %v340
        %1762 = vmatprep.subr.bf16.mxu0 0
        %1763 = vmatpush1.bf16.msra.mxu0 %v339
        %1764 = vmatprep.subr.bf16.mxu0 0
        %1765 = vmatpush2.bf16.msra.mxu0 0
        %1766 = vmatprep.subr.bf16.mxu0 0
        %1767 = vmatpush2.bf16.msra.mxu0 0
        %1768 = vmatprep.subr.bf16.mxu0 0
        %1769 = vmatpush2.bf16.msra.mxu0 0
        %1770 = vmatprep.subr.bf16.mxu0 0
        %1771 = vmatpush2.bf16.msra.mxu0 0
        %1772 = vmatprep.subr.bf16.mxu0 0
        %1773 = vmatpush2.bf16.msra.mxu0 0
        %1774 = vmatprep.subr.bf16.mxu0 0
        %1775 = vmatpush2.bf16.msra.mxu0 0
        %1776 = vmatprep.subr.bf16.mxu0 0
        %1777 = vmatpush2.bf16.msra.mxu0 0
        %1778 = vmatprep.subr.bf16.mxu0 0
        %1779 = vmatpush2.bf16.msra.mxu0 0
        %1780 = vmatprep.mubr.bf16.mxu0 0
        %1781 = vmatmul.mubr.bf16.gmra.mxu0 %v1746
        %v1782 = vpop.f32.mrf.mxu0
        %v1783 = vadd.f32 0.0, %v1782
        %v1784 = vpop.f32.mrf.mxu0
        %v1785 = vpop.f32.mrf.mxu0
        %v1786 = vpop.f32.mrf.mxu0
        %1787 = vdwg.mxu0
        %v1788 = vadd.f32 %v1739, %v1783
        %v1790 = vsel %vm231, %v1646, 0
        %1792 = vmatprep.subr.bf16.mxu0 0
        %1793 = vmatpush1.bf16.msra.mxu0 0
        %1794 = vmatprep.subr.bf16.mxu0 0
        %1795 = vmatpush1.bf16.msra.mxu0 0
        %1796 = vmatprep.subr.bf16.mxu0 0
        %1797 = vmatpush1.bf16.msra.mxu0 0
        %1798 = vmatprep.subr.bf16.mxu0 0
        %1799 = vmatpush1.bf16.msra.mxu0 0
        %1800 = vmatprep.subr.bf16.mxu0 0
        %1801 = vmatpush1.bf16.msra.mxu0 0
        %1802 = vmatprep.subr.bf16.mxu0 0
        %1803 = vmatpush1.bf16.msra.mxu0 0
        %1804 = vmatprep.subr.bf16.mxu0 0
        %1805 = vmatpush1.bf16.msra.mxu0 %v396
        %1806 = vmatprep.subr.bf16.mxu0 0
        %1807 = vmatpush1.bf16.msra.mxu0 %v395
        %1808 = vmatprep.subr.bf16.mxu0 0
        %1809 = vmatpush2.bf16.msra.mxu0 0
        %1810 = vmatprep.subr.bf16.mxu0 0
        %1811 = vmatpush2.bf16.msra.mxu0 0
        %1812 = vmatprep.subr.bf16.mxu0 0
        %1813 = vmatpush2.bf16.msra.mxu0 0
        %1814 = vmatprep.subr.bf16.mxu0 0
        %1815 = vmatpush2.bf16.msra.mxu0 0
        %1816 = vmatprep.subr.bf16.mxu0 0
        %1817 = vmatpush2.bf16.msra.mxu0 0
        %1818 = vmatprep.subr.bf16.mxu0 0
        %1819 = vmatpush2.bf16.msra.mxu0 0
        %1820 = vmatprep.subr.bf16.mxu0 0
        %1821 = vmatpush2.bf16.msra.mxu0 0
        %1822 = vmatprep.subr.bf16.mxu0 0
        %1823 = vmatpush2.bf16.msra.mxu0 0
        %1824 = vmatprep.mubr.bf16.mxu0 0
        %1825 = vmatmul.mubr.bf16.gmra.mxu0 %v1790
        %v1826 = vpop.f32.mrf.mxu0
        %v1827 = vadd.f32 0.0, %v1826
        %v1828 = vpop.f32.mrf.mxu0
        %v1829 = vpop.f32.mrf.mxu0
        %v1830 = vpop.f32.mrf.mxu0
        %1831 = vdwg.mxu0
        %v1832 = vadd.f32 %v1788, %v1827
        %v1834 = vunpack.c.l.b16 %v1646
        %v1835 = vpack.c.b16 %v1834, %v1834
        %v1837 = vshrl.u32 %v1835, 16
        %v1839 = vshll.u32 %v1835, 16
        %v1841 = vrot.slane %v1839, 1
        %v1842 = vor.u32 %v1837, %v1841
        %v1844 = vsel %vm231, %v1842, 0
        %1846 = vmatprep.subr.bf16.mxu0 0
        %1847 = vmatpush1.bf16.msra.mxu0 0
        %1848 = vmatprep.subr.bf16.mxu0 0
        %1849 = vmatpush1.bf16.msra.mxu0 0
        %1850 = vmatprep.subr.bf16.mxu0 0
        %1851 = vmatpush1.bf16.msra.mxu0 0
        %1852 = vmatprep.subr.bf16.mxu0 0
        %1853 = vmatpush1.bf16.msra.mxu0 0
        %1854 = vmatprep.subr.bf16.mxu0 0
        %1855 = vmatpush1.bf16.msra.mxu0 0
        %1856 = vmatprep.subr.bf16.mxu0 0
        %1857 = vmatpush1.bf16.msra.mxu0 0
        %1858 = vmatprep.subr.bf16.mxu0 0
        %1859 = vmatpush1.bf16.msra.mxu0 %v462
        %1860 = vmatprep.subr.bf16.mxu0 0
        %1861 = vmatpush1.bf16.msra.mxu0 %v461
        %1862 = vmatprep.subr.bf16.mxu0 0
        %1863 = vmatpush2.bf16.msra.mxu0 0
        %1864 = vmatprep.subr.bf16.mxu0 0
        %1865 = vmatpush2.bf16.msra.mxu0 0
        %1866 = vmatprep.subr.bf16.mxu0 0
        %1867 = vmatpush2.bf16.msra.mxu0 0
        %1868 = vmatprep.subr.bf16.mxu0 0
        %1869 = vmatpush2.bf16.msra.mxu0 0
        %1870 = vmatprep.subr.bf16.mxu0 0
        %1871 = vmatpush2.bf16.msra.mxu0 0
        %1872 = vmatprep.subr.bf16.mxu0 0
        %1873 = vmatpush2.bf16.msra.mxu0 0
        %1874 = vmatprep.subr.bf16.mxu0 0
        %1875 = vmatpush2.bf16.msra.mxu0 0
        %1876 = vmatprep.subr.bf16.mxu0 0
        %1877 = vmatpush2.bf16.msra.mxu0 0
        %1878 = vmatprep.mubr.bf16.mxu0 0
        %1879 = vmatmul.mubr.bf16.gmra.mxu0 %v1844
        %v1880 = vpop.f32.mrf.mxu0
        %v1881 = vadd.f32 0.0, %v1880
        %v1882 = vpop.f32.mrf.mxu0
        %v1883 = vpop.f32.mrf.mxu0
        %v1884 = vpop.f32.mrf.mxu0
        %1885 = vdwg.mxu0
        %v1886 = vadd.f32 %v1832, %v1881
        %v1887 = vrot.slane %v1835, 1
        %v1889 = vsel %vm231, %v1887, 0
        %1891 = vmatprep.subr.bf16.mxu0 0
        %1892 = vmatpush1.bf16.msra.mxu0 0
        %1893 = vmatprep.subr.bf16.mxu0 0
        %1894 = vmatpush1.bf16.msra.mxu0 0
        %1895 = vmatprep.subr.bf16.mxu0 0
        %1896 = vmatpush1.bf16.msra.mxu0 0
        %1897 = vmatprep.subr.bf16.mxu0 0
        %1898 = vmatpush1.bf16.msra.mxu0 0
        %1899 = vmatprep.subr.bf16.mxu0 0
        %1900 = vmatpush1.bf16.msra.mxu0 0
        %1901 = vmatprep.subr.bf16.mxu0 0
        %1902 = vmatpush1.bf16.msra.mxu0 0
        %1903 = vmatprep.subr.bf16.mxu0 0
        %1904 = vmatpush1.bf16.msra.mxu0 %v519
        %1905 = vmatprep.subr.bf16.mxu0 0
        %1906 = vmatpush1.bf16.msra.mxu0 %v518
        %1907 = vmatprep.subr.bf16.mxu0 0
        %1908 = vmatpush2.bf16.msra.mxu0 0
        %1909 = vmatprep.subr.bf16.mxu0 0
        %1910 = vmatpush2.bf16.msra.mxu0 0
        %1911 = vmatprep.subr.bf16.mxu0 0
        %1912 = vmatpush2.bf16.msra.mxu0 0
        %1913 = vmatprep.subr.bf16.mxu0 0
        %1914 = vmatpush2.bf16.msra.mxu0 0
        %1915 = vmatprep.subr.bf16.mxu0 0
        %1916 = vmatpush2.bf16.msra.mxu0 0
        %1917 = vmatprep.subr.bf16.mxu0 0
        %1918 = vmatpush2.bf16.msra.mxu0 0
        %1919 = vmatprep.subr.bf16.mxu0 0
        %1920 = vmatpush2.bf16.msra.mxu0 0
        %1921 = vmatprep.subr.bf16.mxu0 0
        %1922 = vmatpush2.bf16.msra.mxu0 0
        %1923 = vmatprep.mubr.bf16.mxu0 0
        %1924 = vmatmul.mubr.bf16.gmra.mxu0 %v1889
        %v1925 = vpop.f32.mrf.mxu0
        %v1926 = vadd.f32 0.0, %v1925
        %v1927 = vpop.f32.mrf.mxu0
        %v1928 = vpop.f32.mrf.mxu0
        %v1929 = vpop.f32.mrf.mxu0
        %1930 = vdwg.mxu0
        %v1931 = vadd.f32 %v1886, %v1926
        %v1933 = vsel %vm231, %v1647, 0
        %1935 = vmatprep.subr.bf16.mxu0 0
        %1936 = vmatpush1.bf16.msra.mxu0 0
        %1937 = vmatprep.subr.bf16.mxu0 0
        %1938 = vmatpush1.bf16.msra.mxu0 0
        %1939 = vmatprep.subr.bf16.mxu0 0
        %1940 = vmatpush1.bf16.msra.mxu0 0
        %1941 = vmatprep.subr.bf16.mxu0 0
        %1942 = vmatpush1.bf16.msra.mxu0 0
        %1943 = vmatprep.subr.bf16.mxu0 0
        %1944 = vmatpush1.bf16.msra.mxu0 0
        %1945 = vmatprep.subr.bf16.mxu0 0
        %1946 = vmatpush1.bf16.msra.mxu0 0
        %1947 = vmatprep.subr.bf16.mxu0 0
        %1948 = vmatpush1.bf16.msra.mxu0 %v575
        %1949 = vmatprep.subr.bf16.mxu0 0
        %1950 = vmatpush1.bf16.msra.mxu0 %v574
        %1951 = vmatprep.subr.bf16.mxu0 0
        %1952 = vmatpush2.bf16.msra.mxu0 0
        %1953 = vmatprep.subr.bf16.mxu0 0
        %1954 = vmatpush2.bf16.msra.mxu0 0
        %1955 = vmatprep.subr.bf16.mxu0 0
        %1956 = vmatpush2.bf16.msra.mxu0 0
        %1957 = vmatprep.subr.bf16.mxu0 0
        %1958 = vmatpush2.bf16.msra.mxu0 0
        %1959 = vmatprep.subr.bf16.mxu0 0
        %1960 = vmatpush2.bf16.msra.mxu0 0
        %1961 = vmatprep.subr.bf16.mxu0 0
        %1962 = vmatpush2.bf16.msra.mxu0 0
        %1963 = vmatprep.subr.bf16.mxu0 0
        %1964 = vmatpush2.bf16.msra.mxu0 0
        %1965 = vmatprep.subr.bf16.mxu0 0
        %1966 = vmatpush2.bf16.msra.mxu0 0
        %1967 = vmatprep.mubr.bf16.mxu0 0
        %1968 = vmatmul.mubr.bf16.gmra.mxu0 %v1933
        %v1969 = vpop.f32.mrf.mxu0
        %v1970 = vadd.f32 0.0, %v1969
        %v1971 = vpop.f32.mrf.mxu0
        %v1972 = vpop.f32.mrf.mxu0
        %v1973 = vpop.f32.mrf.mxu0
        %1974 = vdwg.mxu0
        %v1975 = vadd.f32 %v1931, %v1970
        %v1977 = vunpack.c.l.b16 %v1647
        %v1978 = vpack.c.b16 %v1977, %v1977
        %v1980 = vshrl.u32 %v1978, 16
        %v1982 = vshll.u32 %v1978, 16
        %v1984 = vrot.slane %v1982, 1
        %v1985 = vor.u32 %v1980, %v1984
        %v1987 = vsel %vm231, %v1985, 0
        %1989 = vmatprep.subr.bf16.mxu0 0
        %1990 = vmatpush1.bf16.msra.mxu0 0
        %1991 = vmatprep.subr.bf16.mxu0 0
        %1992 = vmatpush1.bf16.msra.mxu0 0
        %1993 = vmatprep.subr.bf16.mxu0 0
        %1994 = vmatpush1.bf16.msra.mxu0 0
        %1995 = vmatprep.subr.bf16.mxu0 0
        %1996 = vmatpush1.bf16.msra.mxu0 0
        %1997 = vmatprep.subr.bf16.mxu0 0
        %1998 = vmatpush1.bf16.msra.mxu0 0
        %1999 = vmatprep.subr.bf16.mxu0 0
        %2000 = vmatpush1.bf16.msra.mxu0 0
        %2001 = vmatprep.subr.bf16.mxu0 0
        %2002 = vmatpush1.bf16.msra.mxu0 %v641
        %2003 = vmatprep.subr.bf16.mxu0 0
        %2004 = vmatpush1.bf16.msra.mxu0 %v640
        %2005 = vmatprep.subr.bf16.mxu0 0
        %2006 = vmatpush2.bf16.msra.mxu0 0
        %2007 = vmatprep.subr.bf16.mxu0 0
        %2008 = vmatpush2.bf16.msra.mxu0 0
        %2009 = vmatprep.subr.bf16.mxu0 0
        %2010 = vmatpush2.bf16.msra.mxu0 0
        %2011 = vmatprep.subr.bf16.mxu0 0
        %2012 = vmatpush2.bf16.msra.mxu0 0
        %2013 = vmatprep.subr.bf16.mxu0 0
        %2014 = vmatpush2.bf16.msra.mxu0 0
        %2015 = vmatprep.subr.bf16.mxu0 0
        %2016 = vmatpush2.bf16.msra.mxu0 0
        %2017 = vmatprep.subr.bf16.mxu0 0
        %2018 = vmatpush2.bf16.msra.mxu0 0
        %2019 = vmatprep.subr.bf16.mxu0 0
        %2020 = vmatpush2.bf16.msra.mxu0 0
        %2021 = vmatprep.mubr.bf16.mxu0 0
        %2022 = vmatmul.mubr.bf16.gmra.mxu0 %v1987
        %v2023 = vpop.f32.mrf.mxu0
        %v2024 = vadd.f32 0.0, %v2023
        %v2025 = vpop.f32.mrf.mxu0
        %v2026 = vpop.f32.mrf.mxu0
        %v2027 = vpop.f32.mrf.mxu0
        %2028 = vdwg.mxu0
        %v2029 = vadd.f32 %v1975, %v2024
        %v2030 = vrot.slane %v1978, 1
        %v2032 = vsel %vm231, %v2030, 0
        %2034 = vmatprep.subr.bf16.mxu0 0
        %2035 = vmatpush1.bf16.msra.mxu0 0
        %2036 = vmatprep.subr.bf16.mxu0 0
        %2037 = vmatpush1.bf16.msra.mxu0 0
        %2038 = vmatprep.subr.bf16.mxu0 0
        %2039 = vmatpush1.bf16.msra.mxu0 0
        %2040 = vmatprep.subr.bf16.mxu0 0
        %2041 = vmatpush1.bf16.msra.mxu0 0
        %2042 = vmatprep.subr.bf16.mxu0 0
        %2043 = vmatpush1.bf16.msra.mxu0 0
        %2044 = vmatprep.subr.bf16.mxu0 0
        %2045 = vmatpush1.bf16.msra.mxu0 0
        %2046 = vmatprep.subr.bf16.mxu0 0
        %2047 = vmatpush1.bf16.msra.mxu0 %v698
        %2048 = vmatprep.subr.bf16.mxu0 0
        %2049 = vmatpush1.bf16.msra.mxu0 %v697
        %2050 = vmatprep.subr.bf16.mxu0 0
        %2051 = vmatpush2.bf16.msra.mxu0 0
        %2052 = vmatprep.subr.bf16.mxu0 0
        %2053 = vmatpush2.bf16.msra.mxu0 0
        %2054 = vmatprep.subr.bf16.mxu0 0
        %2055 = vmatpush2.bf16.msra.mxu0 0
        %2056 = vmatprep.subr.bf16.mxu0 0
        %2057 = vmatpush2.bf16.msra.mxu0 0
        %2058 = vmatprep.subr.bf16.mxu0 0
        %2059 = vmatpush2.bf16.msra.mxu0 0
        %2060 = vmatprep.subr.bf16.mxu0 0
        %2061 = vmatpush2.bf16.msra.mxu0 0
        %2062 = vmatprep.subr.bf16.mxu0 0
        %2063 = vmatpush2.bf16.msra.mxu0 0
        %2064 = vmatprep.subr.bf16.mxu0 0
        %2065 = vmatpush2.bf16.msra.mxu0 0
        %2066 = vmatprep.mubr.bf16.mxu0 0
        %2067 = vmatmul.mubr.bf16.gmra.mxu0 %v2032
        %v2068 = vpop.f32.mrf.mxu0
        %v2069 = vadd.f32 0.0, %v2068
        %v2070 = vpop.f32.mrf.mxu0
        %v2071 = vpop.f32.mrf.mxu0
        %v2072 = vpop.f32.mrf.mxu0
        %2073 = vdwg.mxu0
        %v2074 = vadd.f32 %v2029, %v2069
        %v2075 = vadd.f32 %v2074, %v749
        %v2076 = vmax.f32 %v2075, 0.0
        %v2077 = vsel %vm753, %v2076, 0.0
        %v2078 = vrot.slane %v2077, 4
        %v2079 = vadd.f32 %v2077, %v2078
        %v2080 = vrot.slane %v2079, 2
        %v2081 = vadd.f32 %v2079, %v2080
        %v2082 = vrot.slane %v2081, 1
        %v2083 = vadd.f32 %v2081, %v2082
        %v2084 = vadd.f32 %v1643, %v2083
        %v2085 = vmul.f32 %v2084, 0.0625
        %vm2086 = vcmask 516096
        %2087 = vst.msk [vmem:[%s162] sm:$0x1] %vm2086, %v2085
        %s2088 = sand.u32 %s93, 1
        %s2089 = scalar_lea.sflag [#allocation3], %s2088
        %s2090 = sand.u32 %s93, 1
        %s2091 = scalar_lea.vmem [#allocation2], %s2090
        // Predicated region
        $region33: #{image_encoder_forward.3} parent=31 // pred_check
          %p2092 = pneg %p103
        $region34: #{image_encoder_forward.3} parent=31 // pred_check_branch
          %2094 = sbr.rel (%p2092) target = $region36
        $region35: #{image_encoder_forward.3} parent=31 // pred_region
          %s2096 = ssub.s32 16, 16
          %2097 = vsyncadd %s2089, %s2096
          %s2098 = smul.addr %s17, 16
          %s2099 = scalar_lea.hbm %s3, %s2098
          %s2101 = sshll.u32 %s2091, 4
          %s2102 = int_to_ptr.vmem [resolvable:$true] %s2101
          %2104 = dma.vmem_to_hbm [thread:$0]  %s2102, 16, %s2099, %s2089
        $region36: #{image_encoder_forward.3} parent=31 // pred_fallthru
          _
      $region32: #{image_encoder_forward.3} parent=5 // pred_fallthru
        _
      %p2105 = scmp.le.s32.totalorder 2, %s12
      // Predicated region
      $region37: #{image_encoder_forward.3} parent=5 // pred_check
        %p2106 = pneg %p2105
      $region38: #{image_encoder_forward.3} parent=5 // pred_check_branch
        %2108 = sbr.rel (%p2106) target = $region40
      $region39: #{image_encoder_forward.3} parent=5 // pred_region
        %s2109 = ssub.s32 %s12, 2
        // Predicated region
        $region41: #{image_encoder_forward.3} parent=39 // pred_check
          %p2110 = pneg %p109
        $region42: #{image_encoder_forward.3} parent=39 // pred_check_branch
          %2112 = sbr.rel (%p2110) target = $region44
        $region43: #{image_encoder_forward.3} parent=39 // pred_region
          %s2113 = sand.u32 %s94, 1
          %s2114 = scalar_lea.sflag [#allocation3], %s2113
          %s2115 = sand.u32 %s94, 1
          %s2116 = scalar_lea.vmem [#allocation2], %s2115
          %2117 = dma.done %s2114, 16
        $region44: #{image_encoder_forward.3} parent=39 // pred_fallthru
          _
      $region40: #{image_encoder_forward.3} parent=5 // pred_fallthru
        _
    $region6: #{image_encoder_forward.3} parent=1 // loop_footer
      %s16 = sadd.s32 1, %s12
    $region7: #{image_encoder_forward.3} parent=1 // loop_footer_branch
      %11 = sbr.rel target = $region3
    $region8: #{image_encoder_forward.3} parent=1 // loop_exit
      _
    %2118 = vsyncpa [#allocation3], 1
    %s2119 = scalar_lea.sflag [#allocation3], 1
    %2120 = vsyncpa %s2119, 1

</llo_original>
